<compile_context>
chip_gen: v5e
topology: v5e:2x2
jax: 0.10.0
libtpu: 0.0.40
codegen_flags: <defaults>
</compile_context>

<pallas_src>
import functools

import jax
import jax.numpy as jnp
from jax.experimental import pallas as pl
from jax.experimental.pallas import tpu as pltpu


def _round_up(x, m):
    return ((x + m - 1) // m) * m


# ---------------------------------------------------------------------------
# Kernel body: one batch tile, full encode -> reparametrize -> decode.
# ---------------------------------------------------------------------------
def _vae_forward_kernel(
    x_ref, eps_ref,
    w1_ref, b1_ref,        # img_2hid     : (D, HP), (1, HP)
    wms_ref, bms_ref,      # hid_2mu|sigma: (HP, 2*ZP), (1, 2*ZP)   (fused)
    w2_ref, b2_ref,        # z_2hid       : (ZP, HP), (1, HP)
    w3_ref, b3_ref,        # hid_2img     : (HP, D), (1, D)
    xo_ref, ms_ref,
):
    zp = wms_ref.shape[1] // 2
    cdt = w1_ref.dtype            # bf16 MXU operand dtype

    x = x_ref[...].astype(cdt)

    # ---- encode ----
    h = jnp.dot(x, w1_ref[...], preferred_element_type=jnp.float32) + b1_ref[...]
    h = jnp.maximum(h, 0.0)                                     # F.relu (f32)
    musig = jnp.dot(h.astype(cdt), wms_ref[...],
                    preferred_element_type=jnp.float32) + bms_ref[...]
    mu = musig[:, :zp]
    sigma = musig[:, zp:]

    # ---- reparametrize (f32) ----
    z = mu + sigma * eps_ref[...]

    # ---- decode ----
    nh = jnp.dot(z.astype(cdt), w2_ref[...],
                 preferred_element_type=jnp.float32) + b2_ref[...]
    nh = jnp.maximum(nh, 0.0)                                   # F.relu (f32)
    logits = jnp.dot(nh.astype(cdt), w3_ref[...],
                     preferred_element_type=jnp.float32) + b3_ref[...]

    xo_ref[...] = jax.nn.sigmoid(logits).astype(xo_ref.dtype)   # torch.sigmoid
    ms_ref[...] = musig.astype(ms_ref.dtype)                    # packed [mu | sigma]


# ---------------------------------------------------------------------------
# One-time parameter packing (transpose / pad / fuse / bf16-cast).
# Runs OUTSIDE the per-step forward, so no per-call weight transposes.
# ---------------------------------------------------------------------------
def pack_vae_params(params, compute_dtype=jnp.bfloat16):
    w1, b1 = params["img_2hid"]      # (H, D), (H,)   torch layout (out, in)
    wmu, bmu = params["hid_2mu"]     # (Z, H), (Z,)
    wsg, bsg = params["hid_2sigma"]  # (Z, H), (Z,)
    w2, b2 = params["z_2hid"]        # (H, Z), (H,)
    w3, b3 = params["hid_2img"]      # (D, H), (D,)

    H, D = w1.shape
    Z = wmu.shape[0]
    HP = _round_up(H, 128)           # 200 -> 256
    ZP = _round_up(Z, 64)            # 32  -> 64  (so 2*ZP is a 128-lane multiple)

    f32 = jnp.float32

    w1p = jnp.zeros((D, HP), f32).at[:, :H].set(w1.T)
    b1p = jnp.zeros((1, HP), f32).at[:, :H].set(b1)

    wmsp = jnp.zeros((HP, 2 * ZP), f32)
    wmsp = wmsp.at[:H, :Z].set(wmu.T).at[:H, ZP:ZP + Z].set(wsg.T)
    bmsp = jnp.zeros((1, 2 * ZP), f32)
    bmsp = bmsp.at[:, :Z].set(bmu).at[:, ZP:ZP + Z].set(bsg)

    w2p = jnp.zeros((ZP, HP), f32).at[:Z, :H].set(w2.T)
    b2p = jnp.zeros((1, HP), f32).at[:, :H].set(b2)

    w3p = jnp.zeros((HP, D), f32).at[:H, :].set(w3.T)
    b3p = b3.reshape(1, D).astype(f32)

    return {
        "w1": w1p.astype(compute_dtype), "b1": b1p,
        "wms": wmsp.astype(compute_dtype), "bms": bmsp,
        "w2": w2p.astype(compute_dtype), "b2": b2p,
        "w3": w3p.astype(compute_dtype), "b3": b3p,
    }


# ---------------------------------------------------------------------------
# Forward pass wrapper.
# ---------------------------------------------------------------------------
@functools.partial(jax.jit, static_argnames=("z_dim", "batch_tile"))
def vae_forward(x, eps, packed, *, z_dim, batch_tile=128):
    B, D = x.shape
    w1, b1 = packed["w1"], packed["b1"]
    wms, bms = packed["wms"], packed["bms"]
    w2, b2 = packed["w2"], packed["b2"]
    w3, b3 = packed["w3"], packed["b3"]

    HP = w1.shape[1]
    ZP = wms.shape[1] // 2

    # Pad batch to a multiple of the tile; padded rows are zeros (harmless).
    Bp = _round_up(B, batch_tile)
    xp = jnp.zeros((Bp, D), x.dtype).at[:B, :].set(x)
    epsp = jnp.zeros((Bp, ZP), x.dtype).at[:B, :z_dim].set(eps)

    grid = (Bp // batch_tile,)

    def _tiled(shape):
        return pl.BlockSpec(shape, lambda i: (i, 0))

    def _resident(shape):
        return pl.BlockSpec(shape, lambda i: (0, 0))

    flops = 2 * Bp * (D * HP + HP * (2 * ZP) + ZP * HP + HP * D)
    bytes_accessed = sum(int(a.size) * a.dtype.itemsize
                         for a in (xp, epsp, w1, b1, wms, bms, w2, b2, w3, b3))
    bytes_accessed += Bp * D * 4 + Bp * (2 * ZP) * 4  # outputs

    xo, ms = pl.pallas_call(
        _vae_forward_kernel,
        out_shape=(
            jax.ShapeDtypeStruct((Bp, D), x.dtype),        # reconstructed x (padded batch)
            jax.ShapeDtypeStruct((Bp, 2 * ZP), x.dtype),   # packed [mu | sigma]
        ),
        grid_spec=pltpu.PrefetchScalarGridSpec(
            num_scalar_prefetch=0,
            grid=grid,
            in_specs=[
                _tiled((batch_tile, D)),
                _tiled((batch_tile, ZP)),
                _resident(w1.shape), _resident(b1.shape),
                _resident(wms.shape), _resident(bms.shape),
                _resident(w2.shape), _resident(b2.shape),
                _resident(w3.shape), _resident(b3.shape),
            ],
            out_specs=(
                _tiled((batch_tile, D)),
                _tiled((batch_tile, 2 * ZP)),
            ),
        ),
        compiler_params=pltpu.CompilerParams(
            dimension_semantics=("parallel",),
            vmem_limit_bytes=32 << 20,
        ),
        cost_estimate=pl.CostEstimate(
            flops=flops,
            transcendentals=Bp * D,
            bytes_accessed=bytes_accessed,
        ),
    )(xp, epsp, w1, b1, wms, bms, w2, b2, w3, b3)

    x_recon = xo[:B]
    mu = ms[:B, :z_dim]
    sigma = ms[:B, ZP:ZP + z_dim]
    return x_recon, mu, sigma


# ---------------------------------------------------------------------------
# Parameter init (torch.nn.Linear default) and pure-JAX reference.
# ---------------------------------------------------------------------------
def _init_linear(key, out_features, in_features, dtype=jnp.float32):
    kw, kb = jax.random.split(key)
    bound = 1.0 / (in_features ** 0.5)
    w = jax.random.uniform(kw, (out_features, in_features), dtype, -bound, bound)
    b = jax.random.uniform(kb, (out_features,), dtype, -bound, bound)
    return w, b


def init_vae_params(key, input_dim, z_dim, h_dim=200):
    keys = jax.random.split(key, 5)
    return {
        "img_2hid": _init_linear(keys[0], h_dim, input_dim),
        "hid_2mu": _init_linear(keys[1], z_dim, h_dim),
        "hid_2sigma": _init_linear(keys[2], z_dim, h_dim),
        "z_2hid": _init_linear(keys[3], h_dim, z_dim),
        "hid_2img": _init_linear(keys[4], input_dim, h_dim),
    }


def vae_forward_ref(x, eps, params):
    """Pure-JAX (f32) reference of the PyTorch forward."""
    w1, b1 = params["img_2hid"]
    wmu, bmu = params["hid_2mu"]
    wsg, bsg = params["hid_2sigma"]
    w2, b2 = params["z_2hid"]
    w3, b3 = params["hid_2img"]
    h = jax.nn.relu(x @ w1.T + b1)
    mu = h @ wmu.T + bmu
    sigma = h @ wsg.T + bsg
    z = mu + sigma * eps
    nh = jax.nn.relu(z @ w2.T + b2)
    xr = jax.nn.sigmoid(nh @ w3.T + b3)
    return xr, mu, sigma


if __name__ == "__main__":
    # Flattened-image MLP VAE shapes; batch large enough to exercise the 2-step grid.
    B, INPUT_DIM, Z_DIM, H_DIM = 256, 256, 32, 200

    key = jax.random.PRNGKey(0)
    k_params, k_x, k_eps = jax.random.split(key, 3)

    params = init_vae_params(k_params, INPUT_DIM, Z_DIM, H_DIM)
    packed = pack_vae_params(params)                     # one-time pack (outside hot path)

    x = jax.random.uniform(k_x, (B, INPUT_DIM), jnp.float32)   # image-like inputs in [0,1)
    # TODO(synk): epsilon is drawn host-side (jax.random.normal) to mirror
    # torch.randn_like deterministically, rather than in-kernel via pltpu.prng_*.
    eps = jax.random.normal(k_eps, (B, Z_DIM), jnp.float32)

    x_recon, mu, sigma = vae_forward(x, eps, packed, z_dim=Z_DIM)
    jax.block_until_ready((x_recon, mu, sigma))

    # Sanity check vs. f32 reference (tolerance relaxed for bf16 MXU operands).
    xr_ref, mu_ref, sg_ref = vae_forward_ref(x, eps, params)
    assert x_recon.shape == (B, INPUT_DIM) and mu.shape == (B, Z_DIM) and sigma.shape == (B, Z_DIM)
    assert jnp.allclose(x_recon, xr_ref, atol=5e-2, rtol=5e-2), float(jnp.max(jnp.abs(x_recon - xr_ref)))
    assert jnp.allclose(mu, mu_ref, atol=5e-2, rtol=5e-2), float(jnp.max(jnp.abs(mu - mu_ref)))
    assert jnp.allclose(sigma, sg_ref, atol=5e-2, rtol=5e-2), float(jnp.max(jnp.abs(sigma - sg_ref)))

    print("KERNEL_OK")
</pallas_src>

<mosaic_0001>
module attributes {stable_mosaic.version = 11 : i64} {
  func.func @_vae_forward_kernel(%arg0: i32, %arg1: memref<128x256xf32, #tpu.memory_space<vmem>>, %arg2: memref<128x64xf32, #tpu.memory_space<vmem>>, %arg3: memref<256x256xbf16, #tpu.memory_space<vmem>>, %arg4: memref<1x256xf32, #tpu.memory_space<vmem>>, %arg5: memref<256x128xbf16, #tpu.memory_space<vmem>>, %arg6: memref<1x128xf32, #tpu.memory_space<vmem>>, %arg7: memref<64x256xbf16, #tpu.memory_space<vmem>>, %arg8: memref<1x256xf32, #tpu.memory_space<vmem>>, %arg9: memref<256x256xbf16, #tpu.memory_space<vmem>>, %arg10: memref<1x256xf32, #tpu.memory_space<vmem>>, %arg11: memref<128x256xf32, #tpu.memory_space<vmem>>, %arg12: memref<128x128xf32, #tpu.memory_space<vmem>>) attributes {dimension_semantics = [#tpu.dimension_semantics<parallel>], iteration_bounds = array<i64: 2>, scalar_prefetch = 0 : i64, scratch_operands = 0 : i64, tpu.core_type = #tpu.core_type<tc>, window_params = [{transform_indices = @transform_0, window_bounds = array<i64: 128, 256>}, {transform_indices = @transform_1, window_bounds = array<i64: 128, 64>}, {pipeline_mode = #tpu.pipeline_mode<synchronous>, transform_indices = @transform_2, window_bounds = array<i64: 256, 256>}, {pipeline_mode = #tpu.pipeline_mode<synchronous>, transform_indices = @transform_3, window_bounds = array<i64: 1, 256>}, {pipeline_mode = #tpu.pipeline_mode<synchronous>, transform_indices = @transform_4, window_bounds = array<i64: 256, 128>}, {pipeline_mode = #tpu.pipeline_mode<synchronous>, transform_indices = @transform_5, window_bounds = array<i64: 1, 128>}, {pipeline_mode = #tpu.pipeline_mode<synchronous>, transform_indices = @transform_6, window_bounds = array<i64: 64, 256>}, {pipeline_mode = #tpu.pipeline_mode<synchronous>, transform_indices = @transform_7, window_bounds = array<i64: 1, 256>}, {pipeline_mode = #tpu.pipeline_mode<synchronous>, transform_indices = @transform_8, window_bounds = array<i64: 256, 256>}, {pipeline_mode = #tpu.pipeline_mode<synchronous>, transform_indices = @transform_9, window_bounds = array<i64: 1, 256>}, {transform_indices = @transform_10, window_bounds = array<i64: 128, 256>}, {transform_indices = @transform_11, window_bounds = array<i64: 128, 128>}]} {
    %c0 = arith.constant 0 : index
    %c0_0 = arith.constant 0 : index
    %0 = vector.load %arg1[%c0, %c0_0] : memref<128x256xf32, #tpu.memory_space<vmem>>, vector<128x256xf32>
    %1 = arith.truncf %0 : vector<128x256xf32> to vector<128x256xbf16>
    %c0_1 = arith.constant 0 : index
    %c0_2 = arith.constant 0 : index
    %2 = vector.load %arg3[%c0_1, %c0_2] : memref<256x256xbf16, #tpu.memory_space<vmem>>, vector<256x256xbf16>
    %cst = arith.constant dense<0.000000e+00> : vector<128x256xf32>
    %3 = tpu.matmul %1, %2, %cst {dimension_numbers = #tpu.dot_dimension_numbers<[1], [0], [0], [1], [0, 0, 1, 1], [], []>} : vector<128x256xbf16>, vector<256x256xbf16>, vector<128x256xf32> -> vector<128x256xf32>
    %c0_3 = arith.constant 0 : index
    %c0_4 = arith.constant 0 : index
    %4 = vector.load %arg4[%c0_3, %c0_4] : memref<1x256xf32, #tpu.memory_space<vmem>>, vector<1x256xf32>
    %5 = vector.broadcast %4 : vector<1x256xf32> to vector<128x256xf32>
    %6 = arith.addf %3, %5 : vector<128x256xf32>
    %cst_5 = arith.constant 0.000000e+00 : f32
    %7 = vector.broadcast %cst_5 : f32 to vector<128x256xf32>
    %8 = arith.maximumf %6, %7 : vector<128x256xf32>
    %9 = arith.truncf %8 : vector<128x256xf32> to vector<128x256xbf16>
    %c0_6 = arith.constant 0 : index
    %c0_7 = arith.constant 0 : index
    %10 = vector.load %arg5[%c0_6, %c0_7] : memref<256x128xbf16, #tpu.memory_space<vmem>>, vector<256x128xbf16>
    %cst_8 = arith.constant dense<0.000000e+00> : vector<128x128xf32>
    %11 = tpu.matmul %9, %10, %cst_8 {dimension_numbers = #tpu.dot_dimension_numbers<[1], [0], [0], [1], [0, 0, 1, 1], [], []>} : vector<128x256xbf16>, vector<256x128xbf16>, vector<128x128xf32> -> vector<128x128xf32>
    %c0_9 = arith.constant 0 : index
    %c0_10 = arith.constant 0 : index
    %12 = vector.load %arg6[%c0_9, %c0_10] : memref<1x128xf32, #tpu.memory_space<vmem>>, vector<1x128xf32>
    %13 = vector.broadcast %12 : vector<1x128xf32> to vector<128x128xf32>
    %14 = arith.addf %11, %13 : vector<128x128xf32>
    %15 = vector.extract_strided_slice %14 {offsets = [0, 0], sizes = [128, 64], strides = [1, 1]} : vector<128x128xf32> to vector<128x64xf32>
    %16 = vector.extract_strided_slice %14 {offsets = [0, 64], sizes = [128, 64], strides = [1, 1]} : vector<128x128xf32> to vector<128x64xf32>
    %c0_11 = arith.constant 0 : index
    %c0_12 = arith.constant 0 : index
    %17 = vector.load %arg2[%c0_11, %c0_12] : memref<128x64xf32, #tpu.memory_space<vmem>>, vector<128x64xf32>
    %18 = arith.mulf %16, %17 : vector<128x64xf32>
    %19 = arith.addf %15, %18 : vector<128x64xf32>
    %20 = arith.truncf %19 : vector<128x64xf32> to vector<128x64xbf16>
    %c0_13 = arith.constant 0 : index
    %c0_14 = arith.constant 0 : index
    %21 = vector.load %arg7[%c0_13, %c0_14] : memref<64x256xbf16, #tpu.memory_space<vmem>>, vector<64x256xbf16>
    %cst_15 = arith.constant dense<0.000000e+00> : vector<128x256xf32>
    %22 = tpu.matmul %20, %21, %cst_15 {dimension_numbers = #tpu.dot_dimension_numbers<[1], [0], [0], [1], [0, 0, 1, 1], [], []>} : vector<128x64xbf16>, vector<64x256xbf16>, vector<128x256xf32> -> vector<128x256xf32>
    %c0_16 = arith.constant 0 : index
    %c0_17 = arith.constant 0 : index
    %23 = vector.load %arg8[%c0_16, %c0_17] : memref<1x256xf32, #tpu.memory_space<vmem>>, vector<1x256xf32>
    %24 = vector.broadcast %23 : vector<1x256xf32> to vector<128x256xf32>
    %25 = arith.addf %22, %24 : vector<128x256xf32>
    %cst_18 = arith.constant 0.000000e+00 : f32
    %26 = vector.broadcast %cst_18 : f32 to vector<128x256xf32>
    %27 = arith.maximumf %25, %26 : vector<128x256xf32>
    %28 = arith.truncf %27 : vector<128x256xf32> to vector<128x256xbf16>
    %c0_19 = arith.constant 0 : index
    %c0_20 = arith.constant 0 : index
    %29 = vector.load %arg9[%c0_19, %c0_20] : memref<256x256xbf16, #tpu.memory_space<vmem>>, vector<256x256xbf16>
    %cst_21 = arith.constant dense<0.000000e+00> : vector<128x256xf32>
    %30 = tpu.matmul %28, %29, %cst_21 {dimension_numbers = #tpu.dot_dimension_numbers<[1], [0], [0], [1], [0, 0, 1, 1], [], []>} : vector<128x256xbf16>, vector<256x256xbf16>, vector<128x256xf32> -> vector<128x256xf32>
    %c0_22 = arith.constant 0 : index
    %c0_23 = arith.constant 0 : index
    %31 = vector.load %arg10[%c0_22, %c0_23] : memref<1x256xf32, #tpu.memory_space<vmem>>, vector<1x256xf32>
    %32 = vector.broadcast %31 : vector<1x256xf32> to vector<128x256xf32>
    %33 = arith.addf %30, %32 : vector<128x256xf32>
    %34 = arith.negf %33 : vector<128x256xf32>
    %35 = math.exp %34 : vector<128x256xf32>
    %cst_24 = arith.constant 1.000000e+00 : f32
    %36 = vector.broadcast %cst_24 : f32 to vector<128x256xf32>
    %37 = arith.addf %36, %35 : vector<128x256xf32>
    %38 = arith.divf %36, %37 : vector<128x256xf32>
    %c0_25 = arith.constant 0 : index
    %c0_26 = arith.constant 0 : index
    %39 = vector.load %arg11[%c0_25, %c0_26] : memref<128x256xf32, #tpu.memory_space<vmem>>, vector<128x256xf32>
    tpu.vector_store %arg11[%c0_25, %c0_26], %38 {strides = array<i32>} : memref<128x256xf32, #tpu.memory_space<vmem>>, vector<128x256xf32>,
    %c0_27 = arith.constant 0 : index
    %c0_28 = arith.constant 0 : index
    %40 = vector.load %arg12[%c0_27, %c0_28] : memref<128x128xf32, #tpu.memory_space<vmem>>, vector<128x128xf32>
    tpu.vector_store %arg12[%c0_27, %c0_28], %14 {strides = array<i32>} : memref<128x128xf32, #tpu.memory_space<vmem>>, vector<128x128xf32>,
    return
  }
  func.func @transform_0(%arg0: i32) -> (i32, i32) {
    %c0_i32 = arith.constant 0 : i32
    %c0_i32_0 = arith.constant 0 : i32
    return %arg0, %c0_i32 : i32, i32
  }
  func.func @transform_1(%arg0: i32) -> (i32, i32) {
    %c0_i32 = arith.constant 0 : i32
    %c0_i32_0 = arith.constant 0 : i32
    return %arg0, %c0_i32 : i32, i32
  }
  func.func @transform_2(%arg0: i32) -> (i32, i32) {
    %c0_i32 = arith.constant 0 : i32
    %c0_i32_0 = arith.constant 0 : i32
    %c0_i32_1 = arith.constant 0 : i32
    return %c0_i32, %c0_i32_0 : i32, i32
  }
  func.func @transform_3(%arg0: i32) -> (i32, i32) {
    %c0_i32 = arith.constant 0 : i32
    %c0_i32_0 = arith.constant 0 : i32
    %c0_i32_1 = arith.constant 0 : i32
    return %c0_i32, %c0_i32_0 : i32, i32
  }
  func.func @transform_4(%arg0: i32) -> (i32, i32) {
    %c0_i32 = arith.constant 0 : i32
    %c0_i32_0 = arith.constant 0 : i32
    %c0_i32_1 = arith.constant 0 : i32
    return %c0_i32, %c0_i32_0 : i32, i32
  }
  func.func @transform_5(%arg0: i32) -> (i32, i32) {
    %c0_i32 = arith.constant 0 : i32
    %c0_i32_0 = arith.constant 0 : i32
    %c0_i32_1 = arith.constant 0 : i32
    return %c0_i32, %c0_i32_0 : i32, i32
  }
  func.func @transform_6(%arg0: i32) -> (i32, i32) {
    %c0_i32 = arith.constant 0 : i32
    %c0_i32_0 = arith.constant 0 : i32
    %c0_i32_1 = arith.constant 0 : i32
    return %c0_i32, %c0_i32_0 : i32, i32
  }
  func.func @transform_7(%arg0: i32) -> (i32, i32) {
    %c0_i32 = arith.constant 0 : i32
    %c0_i32_0 = arith.constant 0 : i32
    %c0_i32_1 = arith.constant 0 : i32
    return %c0_i32, %c0_i32_0 : i32, i32
  }
  func.func @transform_8(%arg0: i32) -> (i32, i32) {
    %c0_i32 = arith.constant 0 : i32
    %c0_i32_0 = arith.constant 0 : i32
    %c0_i32_1 = arith.constant 0 : i32
    return %c0_i32, %c0_i32_0 : i32, i32
  }
  func.func @transform_9(%arg0: i32) -> (i32, i32) {
    %c0_i32 = arith.constant 0 : i32
    %c0_i32_0 = arith.constant 0 : i32
    %c0_i32_1 = arith.constant 0 : i32
    return %c0_i32, %c0_i32_0 : i32, i32
  }
  func.func @transform_10(%arg0: i32) -> (i32, i32) {
    %c0_i32 = arith.constant 0 : i32
    %c0_i32_0 = arith.constant 0 : i32
    return %arg0, %c0_i32 : i32, i32
  }
  func.func @transform_11(%arg0: i32) -> (i32, i32) {
    %c0_i32 = arith.constant 0 : i32
    %c0_i32_0 = arith.constant 0 : i32
    return %arg0, %c0_i32 : i32, i32
  }
}

</mosaic_0001>

<llo_original>
// kernel: vae_forward.1
$region0: #{vae_forward.1}
  #allocation0 [shape = 'u32[]', space=smem, size = 0x4, offset = 0x4, fixed_abs, tag = 'smem constant byte address 0x4 - core index']
  #allocation1 [shape = 'u32[72,128]{1,0:T(1,128)}', space=vmem, size = 0x9000, scoped, tag = 'internal scratch']
  %s0 = inlined_call_operand.vmem [shape: f32[256,256], index: 0, kind: input, shape index: {}]
  %s1 = inlined_call_operand.vmem [shape: f32[256,64], index: 1, kind: input, shape index: {}]
  %s2 = inlined_call_operand.vmem [shape: bf16[256,256], index: 2, kind: input, shape index: {}]
  %s3 = inlined_call_operand.vmem [shape: f32[1,256], index: 3, kind: input, shape index: {}]
  %s4 = inlined_call_operand.vmem [shape: bf16[256,128], index: 4, kind: input, shape index: {}]
  %s5 = inlined_call_operand.vmem [shape: f32[1,128], index: 5, kind: input, shape index: {}]
  %s6 = inlined_call_operand.vmem [shape: bf16[64,256], index: 6, kind: input, shape index: {}]
  %s7 = inlined_call_operand.vmem [shape: f32[1,256], index: 7, kind: input, shape index: {}]
  %s8 = inlined_call_operand.vmem [shape: bf16[256,256], index: 8, kind: input, shape index: {}]
  %s9 = inlined_call_operand.vmem [shape: f32[1,256], index: 9, kind: input, shape index: {}]
  %s10 = inlined_call_operand.hbm [shape: f32[256,256], index: 10, kind: output, shape index: {0}]
  %s11 = inlined_call_operand.vmem [shape: f32[256,128], index: 11, kind: output, shape index: {1}]
  %12 = xla_tuple %s10, %s11
  %s13 = sld [smem:[#allocation0]]
  $region81: #{vae_forward.1} parent=0
    _
  %s15 = ssub.s32 1, %s13
  %s16 = scalar_select 0, %s15, %s13
  $region1: #{vae_forward.1} parent=0
    #allocation2 [shape = 'u8[262144]{0}', space=vmem, size = 0x40000, scoped, tag = 'output window, operand 0']
    #allocation3 [shape = 's32[2]{0}', space=sflag, size = 0x8, scoped, tag = 'scoped memory for vae_forward.1']
    %17 = vsyncpa [#allocation3], 0
    %s18 = scalar_lea.sflag [#allocation3], 1
    %19 = vsyncpa %s18, 0
    loop: start=0, step=1, limit=4
    $region2: #{vae_forward.1} parent=1 // loop_pre_header
      _
    $region3: #{vae_forward.1} parent=1 // loop_header
      %s21 = sphi 0, %s25
      %p22 = scmp.ge.s32.totalorder %s21, 4
      %s31 = sphi 0, %s33
      %s34 = sphi 0, %s31
      %s35 = sphi 0, %s34
      %s51 = sphi 0, %s35
      %s57 = sphi 0, %s59
      %s60 = sphi 0, %s57
      %s61 = sphi 0, %s60
      %s77 = sphi 0, %s61
      %s81 = sphi 0, %s81
      %s83 = sphi 0, %s81
      %s84 = sphi 0, %s83
      %s98 = sphi 0, %s84
      %s102 = sphi 0, %s102
      %s104 = sphi 0, %s102
      %s105 = sphi 0, %s104
      %s119 = sphi 0, %s105
      %s123 = sphi 0, %s123
      %s125 = sphi 0, %s123
      %s126 = sphi 0, %s125
      %s140 = sphi 0, %s126
      %s144 = sphi 0, %s144
      %s146 = sphi 0, %s144
      %s147 = sphi 0, %s146
      %s161 = sphi 0, %s147
      %s165 = sphi 0, %s165
      %s167 = sphi 0, %s165
      %s168 = sphi 0, %s167
      %s182 = sphi 0, %s168
      %s186 = sphi 0, %s186
      %s188 = sphi 0, %s186
      %s189 = sphi 0, %s188
      %s203 = sphi 0, %s189
      %s207 = sphi 0, %s207
      %s209 = sphi 0, %s207
      %s210 = sphi 0, %s209
      %s224 = sphi 0, %s210
      %s228 = sphi 0, %s228
      %s230 = sphi 0, %s228
      %s231 = sphi 0, %s230
      %s245 = sphi 0, %s231
      %s251 = sphi 0, %s253
      %s254 = sphi 0, %s251
      %s255 = sphi 0, %s254
      %s271 = sphi 0, %s255
      %s277 = sphi 0, %s279
      %s280 = sphi 0, %s277
      %s281 = sphi 0, %s280
      %s297 = sphi 0, %s281
    $region4: #{vae_forward.1} parent=1 // loop_header_branch
      %24 = sbr.rel (%p22) target = $region8
    $region5: #{vae_forward.1} parent=1 // loop_body
      %s26 = ssub.s32 %s21, 1
      %s27 = ssub.s32 %s21, 2
      %s28 = sadd.s32 %s21, 1
      %s29 = ssub.s32 %s21, %s28
      %p30 = scmp.eq.s32.totalorder %s29, 0
      %s32 = sadd.s32 %s31, 1
      %s33 = scalar_select %p30, %s31, %s32
      %p36 = pneg %p30
      %p37 = scmp.eq.s32.totalorder %s21, 1
      %p38 = por %p36, %p37
      %p39 = scmp.ne.s32.totalorder %s31, %s34
      %p40 = scmp.eq.s32.totalorder %s21, 0
      %p41 = por %p39, %p40
      %p42 = scmp.ne.s32.totalorder %s31, %s34
      %p43 = scmp.eq.s32.totalorder %s26, 1
      %p44 = por %p42, %p43
      %p45 = scmp.ne.s32.totalorder %s34, %s35
      %p46 = scmp.eq.s32.totalorder %s26, 0
      %p47 = por %p45, %p46
      %p48 = scmp.ne.s32.totalorder %s34, %s35
      %p49 = scmp.eq.s32.totalorder %s27, 1
      %p50 = por %p48, %p49
      %p52 = scmp.ne.s32.totalorder %s35, %s51
      %p53 = scmp.eq.s32.totalorder %s27, 0
      %p54 = por %p52, %p53
      %s55 = ssub.s32 %s21, %s28
      %p56 = scmp.eq.s32.totalorder %s55, 0
      %s58 = sadd.s32 %s57, 1
      %s59 = scalar_select %p56, %s57, %s58
      %p62 = pneg %p56
      %p63 = scmp.eq.s32.totalorder %s21, 1
      %p64 = por %p62, %p63
      %p65 = scmp.ne.s32.totalorder %s57, %s60
      %p66 = scmp.eq.s32.totalorder %s21, 0
      %p67 = por %p65, %p66
      %p68 = scmp.ne.s32.totalorder %s57, %s60
      %p69 = scmp.eq.s32.totalorder %s26, 1
      %p70 = por %p68, %p69
      %p71 = scmp.ne.s32.totalorder %s60, %s61
      %p72 = scmp.eq.s32.totalorder %s26, 0
      %p73 = por %p71, %p72
      %p74 = scmp.ne.s32.totalorder %s60, %s61
      %p75 = scmp.eq.s32.totalorder %s27, 1
      %p76 = por %p74, %p75
      %p78 = scmp.ne.s32.totalorder %s61, %s77
      %p79 = scmp.eq.s32.totalorder %s27, 0
      %p80 = por %p78, %p79
      %s82 = sadd.s32 %s81, 1
      %p85 = scmp.eq.s32.totalorder %s21, 1
      %p86 = scmp.ne.s32.totalorder %s81, %s83
      %p87 = scmp.eq.s32.totalorder %s21, 0
      %p88 = por %p86, %p87
      %p89 = scmp.ne.s32.totalorder %s81, %s83
      %p90 = scmp.eq.s32.totalorder %s26, 1
      %p91 = por %p89, %p90
      %p92 = scmp.ne.s32.totalorder %s83, %s84
      %p93 = scmp.eq.s32.totalorder %s26, 0
      %p94 = por %p92, %p93
      %p95 = scmp.ne.s32.totalorder %s83, %s84
      %p96 = scmp.eq.s32.totalorder %s27, 1
      %p97 = por %p95, %p96
      %p99 = scmp.ne.s32.totalorder %s84, %s98
      %p100 = scmp.eq.s32.totalorder %s27, 0
      %p101 = por %p99, %p100
      %s103 = sadd.s32 %s102, 1
      %p106 = scmp.eq.s32.totalorder %s21, 1
      %p107 = scmp.ne.s32.totalorder %s102, %s104
      %p108 = scmp.eq.s32.totalorder %s21, 0
      %p109 = por %p107, %p108
      %p110 = scmp.ne.s32.totalorder %s102, %s104
      %p111 = scmp.eq.s32.totalorder %s26, 1
      %p112 = por %p110, %p111
      %p113 = scmp.ne.s32.totalorder %s104, %s105
      %p114 = scmp.eq.s32.totalorder %s26, 0
      %p115 = por %p113, %p114
      %p116 = scmp.ne.s32.totalorder %s104, %s105
      %p117 = scmp.eq.s32.totalorder %s27, 1
      %p118 = por %p116, %p117
      %p120 = scmp.ne.s32.totalorder %s105, %s119
      %p121 = scmp.eq.s32.totalorder %s27, 0
      %p122 = por %p120, %p121
      %s124 = sadd.s32 %s123, 1
      %p127 = scmp.eq.s32.totalorder %s21, 1
      %p128 = scmp.ne.s32.totalorder %s123, %s125
      %p129 = scmp.eq.s32.totalorder %s21, 0
      %p130 = por %p128, %p129
      %p131 = scmp.ne.s32.totalorder %s123, %s125
      %p132 = scmp.eq.s32.totalorder %s26, 1
      %p133 = por %p131, %p132
      %p134 = scmp.ne.s32.totalorder %s125, %s126
      %p135 = scmp.eq.s32.totalorder %s26, 0
      %p136 = por %p134, %p135
      %p137 = scmp.ne.s32.totalorder %s125, %s126
      %p138 = scmp.eq.s32.totalorder %s27, 1
      %p139 = por %p137, %p138
      %p141 = scmp.ne.s32.totalorder %s126, %s140
      %p142 = scmp.eq.s32.totalorder %s27, 0
      %p143 = por %p141, %p142
      %s145 = sadd.s32 %s144, 1
      %p148 = scmp.eq.s32.totalorder %s21, 1
      %p149 = scmp.ne.s32.totalorder %s144, %s146
      %p150 = scmp.eq.s32.totalorder %s21, 0
      %p151 = por %p149, %p150
      %p152 = scmp.ne.s32.totalorder %s144, %s146
      %p153 = scmp.eq.s32.totalorder %s26, 1
      %p154 = por %p152, %p153
      %p155 = scmp.ne.s32.totalorder %s146, %s147
      %p156 = scmp.eq.s32.totalorder %s26, 0
      %p157 = por %p155, %p156
      %p158 = scmp.ne.s32.totalorder %s146, %s147
      %p159 = scmp.eq.s32.totalorder %s27, 1
      %p160 = por %p158, %p159
      %p162 = scmp.ne.s32.totalorder %s147, %s161
      %p163 = scmp.eq.s32.totalorder %s27, 0
      %p164 = por %p162, %p163
      %s166 = sadd.s32 %s165, 1
      %p169 = scmp.eq.s32.totalorder %s21, 1
      %p170 = scmp.ne.s32.totalorder %s165, %s167
      %p171 = scmp.eq.s32.totalorder %s21, 0
      %p172 = por %p170, %p171
      %p173 = scmp.ne.s32.totalorder %s165, %s167
      %p174 = scmp.eq.s32.totalorder %s26, 1
      %p175 = por %p173, %p174
      %p176 = scmp.ne.s32.totalorder %s167, %s168
      %p177 = scmp.eq.s32.totalorder %s26, 0
      %p178 = por %p176, %p177
      %p179 = scmp.ne.s32.totalorder %s167, %s168
      %p180 = scmp.eq.s32.totalorder %s27, 1
      %p181 = por %p179, %p180
      %p183 = scmp.ne.s32.totalorder %s168, %s182
      %p184 = scmp.eq.s32.totalorder %s27, 0
      %p185 = por %p183, %p184
      %s187 = sadd.s32 %s186, 1
      %p190 = scmp.eq.s32.totalorder %s21, 1
      %p191 = scmp.ne.s32.totalorder %s186, %s188
      %p192 = scmp.eq.s32.totalorder %s21, 0
      %p193 = por %p191, %p192
      %p194 = scmp.ne.s32.totalorder %s186, %s188
      %p195 = scmp.eq.s32.totalorder %s26, 1
      %p196 = por %p194, %p195
      %p197 = scmp.ne.s32.totalorder %s188, %s189
      %p198 = scmp.eq.s32.totalorder %s26, 0
      %p199 = por %p197, %p198
      %p200 = scmp.ne.s32.totalorder %s188, %s189
      %p201 = scmp.eq.s32.totalorder %s27, 1
      %p202 = por %p200, %p201
      %p204 = scmp.ne.s32.totalorder %s189, %s203
      %p205 = scmp.eq.s32.totalorder %s27, 0
      %p206 = por %p204, %p205
      %s208 = sadd.s32 %s207, 1
      %p211 = scmp.eq.s32.totalorder %s21, 1
      %p212 = scmp.ne.s32.totalorder %s207, %s209
      %p213 = scmp.eq.s32.totalorder %s21, 0
      %p214 = por %p212, %p213
      %p215 = scmp.ne.s32.totalorder %s207, %s209
      %p216 = scmp.eq.s32.totalorder %s26, 1
      %p217 = por %p215, %p216
      %p218 = scmp.ne.s32.totalorder %s209, %s210
      %p219 = scmp.eq.s32.totalorder %s26, 0
      %p220 = por %p218, %p219
      %p221 = scmp.ne.s32.totalorder %s209, %s210
      %p222 = scmp.eq.s32.totalorder %s27, 1
      %p223 = por %p221, %p222
      %p225 = scmp.ne.s32.totalorder %s210, %s224
      %p226 = scmp.eq.s32.totalorder %s27, 0
      %p227 = por %p225, %p226
      %s229 = sadd.s32 %s228, 1
      %p232 = scmp.eq.s32.totalorder %s21, 1
      %p233 = scmp.ne.s32.totalorder %s228, %s230
      %p234 = scmp.eq.s32.totalorder %s21, 0
      %p235 = por %p233, %p234
      %p236 = scmp.ne.s32.totalorder %s228, %s230
      %p237 = scmp.eq.s32.totalorder %s26, 1
      %p238 = por %p236, %p237
      %p239 = scmp.ne.s32.totalorder %s230, %s231
      %p240 = scmp.eq.s32.totalorder %s26, 0
      %p241 = por %p239, %p240
      %p242 = scmp.ne.s32.totalorder %s230, %s231
      %p243 = scmp.eq.s32.totalorder %s27, 1
      %p244 = por %p242, %p243
      %p246 = scmp.ne.s32.totalorder %s231, %s245
      %p247 = scmp.eq.s32.totalorder %s27, 0
      %p248 = por %p246, %p247
      %s249 = ssub.s32 %s21, %s28
      %p250 = scmp.eq.s32.totalorder %s249, 0
      %s252 = sadd.s32 %s251, 1
      %s253 = scalar_select %p250, %s251, %s252
      %p256 = pneg %p250
      %p257 = scmp.eq.s32.totalorder %s21, 1
      %p258 = por %p256, %p257
      %p259 = scmp.ne.s32.totalorder %s251, %s254
      %p260 = scmp.eq.s32.totalorder %s21, 0
      %p261 = por %p259, %p260
      %p262 = scmp.ne.s32.totalorder %s251, %s254
      %p263 = scmp.eq.s32.totalorder %s26, 1
      %p264 = por %p262, %p263
      %p265 = scmp.ne.s32.totalorder %s254, %s255
      %p266 = scmp.eq.s32.totalorder %s26, 0
      %p267 = por %p265, %p266
      %p268 = scmp.ne.s32.totalorder %s254, %s255
      %p269 = scmp.eq.s32.totalorder %s27, 1
      %p270 = por %p268, %p269
      %p272 = scmp.ne.s32.totalorder %s255, %s271
      %p273 = scmp.eq.s32.totalorder %s27, 0
      %p274 = por %p272, %p273
      %s275 = ssub.s32 %s21, %s28
      %p276 = scmp.eq.s32.totalorder %s275, 0
      %s278 = sadd.s32 %s277, 1
      %s279 = scalar_select %p276, %s277, %s278
      %p282 = pneg %p276
      %p283 = scmp.eq.s32.totalorder %s21, 1
      %p284 = por %p282, %p283
      %p285 = scmp.ne.s32.totalorder %s277, %s280
      %p286 = scmp.eq.s32.totalorder %s21, 0
      %p287 = por %p285, %p286
      %p288 = scmp.ne.s32.totalorder %s277, %s280
      %p289 = scmp.eq.s32.totalorder %s26, 1
      %p290 = por %p288, %p289
      %p291 = scmp.ne.s32.totalorder %s280, %s281
      %p292 = scmp.eq.s32.totalorder %s26, 0
      %p293 = por %p291, %p292
      %p294 = scmp.ne.s32.totalorder %s280, %s281
      %p295 = scmp.eq.s32.totalorder %s27, 1
      %p296 = por %p294, %p295
      %p298 = scmp.ne.s32.totalorder %s281, %s297
      %p299 = scmp.eq.s32.totalorder %s27, 0
      %p300 = por %p298, %p299
      %p301 = scmp.le.s32.totalorder 1, %s21
      %p302 = scmp.lt.s32.totalorder %s21, 3
      %p303 = pnand %p301, %p302
      %p304 = pneg %p303
      // Predicated region
      $region9: #{vae_forward.1} parent=5 // pred_check
        _
      $region10: #{vae_forward.1} parent=5 // pred_check_branch
        %306 = sbr.rel (%p303) target = $region12
      $region11: #{vae_forward.1} parent=5 // pred_region
        %s307 = ssub.s32 %s21, 1
        // Predicated region
        $region13: #{vae_forward.1} parent=11 // pred_check
          %p308 = pneg %p94
        $region14: #{vae_forward.1} parent=11 // pred_check_branch
          %310 = sbr.rel (%p308) target = $region16
        $region15: #{vae_forward.1} parent=11 // pred_region
          _
        $region16: #{vae_forward.1} parent=11 // pred_fallthru
          _
        // Predicated region
        $region17: #{vae_forward.1} parent=11 // pred_check
          %p311 = pneg %p115
        $region18: #{vae_forward.1} parent=11 // pred_check_branch
          %313 = sbr.rel (%p311) target = $region20
        $region19: #{vae_forward.1} parent=11 // pred_region
          _
        $region20: #{vae_forward.1} parent=11 // pred_fallthru
          _
        // Predicated region
        $region21: #{vae_forward.1} parent=11 // pred_check
          %p314 = pneg %p136
        $region22: #{vae_forward.1} parent=11 // pred_check_branch
          %316 = sbr.rel (%p314) target = $region24
        $region23: #{vae_forward.1} parent=11 // pred_region
          _
        $region24: #{vae_forward.1} parent=11 // pred_fallthru
          _
        // Predicated region
        $region25: #{vae_forward.1} parent=11 // pred_check
          %p317 = pneg %p157
        $region26: #{vae_forward.1} parent=11 // pred_check_branch
          %319 = sbr.rel (%p317) target = $region28
        $region27: #{vae_forward.1} parent=11 // pred_region
          _
        $region28: #{vae_forward.1} parent=11 // pred_fallthru
          _
        // Predicated region
        $region29: #{vae_forward.1} parent=11 // pred_check
          %p320 = pneg %p178
        $region30: #{vae_forward.1} parent=11 // pred_check_branch
          %322 = sbr.rel (%p320) target = $region32
        $region31: #{vae_forward.1} parent=11 // pred_region
          _
        $region32: #{vae_forward.1} parent=11 // pred_fallthru
          _
        // Predicated region
        $region33: #{vae_forward.1} parent=11 // pred_check
          %p323 = pneg %p199
        $region34: #{vae_forward.1} parent=11 // pred_check_branch
          %325 = sbr.rel (%p323) target = $region36
        $region35: #{vae_forward.1} parent=11 // pred_region
          _
        $region36: #{vae_forward.1} parent=11 // pred_fallthru
          _
        // Predicated region
        $region37: #{vae_forward.1} parent=11 // pred_check
          %p326 = pneg %p220
        $region38: #{vae_forward.1} parent=11 // pred_check_branch
          %328 = sbr.rel (%p326) target = $region40
        $region39: #{vae_forward.1} parent=11 // pred_region
          _
        $region40: #{vae_forward.1} parent=11 // pred_fallthru
          _
        // Predicated region
        $region41: #{vae_forward.1} parent=11 // pred_check
          %p329 = pneg %p241
        $region42: #{vae_forward.1} parent=11 // pred_check_branch
          %331 = sbr.rel (%p329) target = $region44
        $region43: #{vae_forward.1} parent=11 // pred_region
          _
        $region44: #{vae_forward.1} parent=11 // pred_fallthru
          _
      $region12: #{vae_forward.1} parent=5 // pred_fallthru
        _
      %p332 = scmp.lt.s32.totalorder %s21, 2
      // Predicated region
      $region45: #{vae_forward.1} parent=5 // pred_check
        %p333 = pneg %p332
      $region46: #{vae_forward.1} parent=5 // pred_check_branch
        %335 = sbr.rel (%p333) target = $region48
      $region47: #{vae_forward.1} parent=5 // pred_region
        // Predicated region
        $region49: #{vae_forward.1} parent=47 // pred_check
          %p336 = pneg %p41
        $region50: #{vae_forward.1} parent=47 // pred_check_branch
          %338 = sbr.rel (%p336) target = $region52
        $region51: #{vae_forward.1} parent=47 // pred_region
          %s339 = smul.u32 16, %s21
          %p340 = scmp.lt.s32.totalorder %s339, 31
          %s341 = scalar_select %p340, %s339, 31
          %s342 = smul.addr %s341, 2
          %s343 = smul.addr %s342, 8
          %s344 = scalar_lea.vmem %s0, %s343
          %s345 = smul.u32 16, %s21
        $region52: #{vae_forward.1} parent=47 // pred_fallthru
          _
        // Predicated region
        $region53: #{vae_forward.1} parent=47 // pred_check
          %p346 = pneg %p67
        $region54: #{vae_forward.1} parent=47 // pred_check_branch
          %348 = sbr.rel (%p346) target = $region56
        $region55: #{vae_forward.1} parent=47 // pred_region
          %s349 = smul.u32 16, %s21
          %p350 = scmp.lt.s32.totalorder %s349, 31
          %s351 = scalar_select %p350, %s349, 31
          %s352 = smul.addr %s351, 8
          %s353 = scalar_lea.vmem %s1, %s352
          %s354 = smul.u32 16, %s21
        $region56: #{vae_forward.1} parent=47 // pred_fallthru
          _
      $region48: #{vae_forward.1} parent=5 // pred_fallthru
        _
      %p355 = scmp.le.s32.totalorder 1, %s21
      %p356 = scmp.lt.s32.totalorder %s21, 3
      %p357 = pnand %p355, %p356
      %p358 = pneg %p357
      // Predicated region
      $region57: #{vae_forward.1} parent=5 // pred_check
        _
      $region58: #{vae_forward.1} parent=5 // pred_check_branch
        %360 = sbr.rel (%p357) target = $region60
      $region59: #{vae_forward.1} parent=5 // pred_region
        %s361 = ssub.s32 %s21, 1
        %s362 = smul.u32 16, %s26
        %p363 = scmp.lt.s32.totalorder %s362, 31
        %s364 = scalar_select %p363, %s362, 31
        %s365 = smul.addr %s364, 2
        %s366 = smul.addr %s365, 8
        %s367 = scalar_lea.vmem %s0, %s366
        %p368 = pneg %p47
        %p369 = pneg %p44
        %s370 = smul.u32 16, %s26
        %p371 = scmp.lt.s32.totalorder %s370, 31
        %s372 = scalar_select %p371, %s370, 31
        %s373 = smul.addr %s372, 8
        %s374 = scalar_lea.vmem %s1, %s373
        %p375 = pneg %p73
        %p376 = pneg %p70
        %p377 = pneg %p94
        %p378 = pneg %p91
        %p379 = pneg %p115
        %p380 = pneg %p112
        %p381 = pneg %p136
        %p382 = pneg %p133
        %p383 = pneg %p157
        %p384 = pneg %p154
        %p385 = pneg %p178
        %p386 = pneg %p175
        %p387 = pneg %p199
        %p388 = pneg %p196
        %p389 = pneg %p220
        %p390 = pneg %p217
        %p391 = pneg %p241
        %p392 = pneg %p238
        %p393 = pneg %p267
        %p394 = pneg %p264
        %s395 = sand.u32 %s254, 1
        %s396 = scalar_lea.sflag [#allocation3], %s395
        %s397 = sand.u32 %s254, 1
        %s398 = smul.addr %s397, 256
        %s399 = scalar_lea.vmem [#allocation2], %s398
        %p400 = pneg %p293
        %p401 = pneg %p290
        %s402 = smul.u32 16, %s26
        %p403 = scmp.lt.s32.totalorder %s402, 31
        %s404 = scalar_select %p403, %s402, 31
        %s405 = smul.addr %s404, 8
        %s406 = scalar_lea.vmem %s11, %s405
        %s407 = smul.u32 16, %s26
        %p408 = scmp.lt.s32.totalorder %s407, 31
        %s409 = scalar_select %p408, %s407, 31
        %s410 = smul.addr %s409, 2
        %s411 = smul.addr %s410, 8
        %s412 = scalar_lea.vmem %s0, %s411
        %s413 = smul.u32 16, %s26
        %s414 = smul.u32 16, %s26
        %p415 = scmp.lt.s32.totalorder %s414, 31
        %s416 = scalar_select %p415, %s414, 31
        %s417 = smul.addr %s416, 8
        %s418 = scalar_lea.vmem %s1, %s417
        %s419 = smul.u32 16, %s26
        %s420 = smul.u32 16, %s26
        %s421 = smul.u32 16, %s26
        %p422 = scmp.lt.s32.totalorder %s421, 31
        %s423 = scalar_select %p422, %s421, 31
        %s424 = smul.addr %s423, 8
        %s425 = scalar_lea.vmem %s11, %s424
        %s426 = smul.u32 16, %s26
        %v428 = vld [vmem:[%s412] sm:$0xff]
        %v429 = vld [vmem:[%s412 + $0x8] sm:$0xff]
        %v430 = vld [vmem:[%s412 + $0x10] sm:$0xff]
        %v431 = vld [vmem:[%s412 + $0x18] sm:$0xff]
        %v432 = vld [vmem:[%s412 + $0x20] sm:$0xff]
        %v433 = vld [vmem:[%s412 + $0x28] sm:$0xff]
        %v434 = vld [vmem:[%s412 + $0x30] sm:$0xff]
        %v435 = vld [vmem:[%s412 + $0x38] sm:$0xff]
        %v436 = vld [vmem:[%s412 + $0x40] sm:$0xff]
        %v437 = vld [vmem:[%s412 + $0x48] sm:$0xff]
        %v438 = vld [vmem:[%s412 + $0x50] sm:$0xff]
        %v439 = vld [vmem:[%s412 + $0x58] sm:$0xff]
        %v440 = vld [vmem:[%s412 + $0x60] sm:$0xff]
        %v441 = vld [vmem:[%s412 + $0x68] sm:$0xff]
        %v442 = vld [vmem:[%s412 + $0x70] sm:$0xff]
        %v443 = vld [vmem:[%s412 + $0x78] sm:$0xff]
        %v444 = vld [vmem:[%s412 + $0x80] sm:$0xff]
        %v445 = vld [vmem:[%s412 + $0x88] sm:$0xff]
        %v446 = vld [vmem:[%s412 + $0x90] sm:$0xff]
        %v447 = vld [vmem:[%s412 + $0x98] sm:$0xff]
        %v448 = vld [vmem:[%s412 + $0xa0] sm:$0xff]
        %v449 = vld [vmem:[%s412 + $0xa8] sm:$0xff]
        %v450 = vld [vmem:[%s412 + $0xb0] sm:$0xff]
        %v451 = vld [vmem:[%s412 + $0xb8] sm:$0xff]
        %v452 = vld [vmem:[%s412 + $0xc0] sm:$0xff]
        %v453 = vld [vmem:[%s412 + $0xc8] sm:$0xff]
        %v454 = vld [vmem:[%s412 + $0xd0] sm:$0xff]
        %v455 = vld [vmem:[%s412 + $0xd8] sm:$0xff]
        %v456 = vld [vmem:[%s412 + $0xe0] sm:$0xff]
        %v457 = vld [vmem:[%s412 + $0xe8] sm:$0xff]
        %v458 = vld [vmem:[%s412 + $0xf0] sm:$0xff]
        %v459 = vld [vmem:[%s412 + $0xf8] sm:$0xff]
        %v460 = vpack.c.bf16 %v430, %v428
        %v461 = vpack.c.bf16 %v431, %v429
        %v462 = vpack.c.bf16 %v434, %v432
        %v463 = vpack.c.bf16 %v435, %v433
        %v464 = vpack.c.bf16 %v438, %v436
        %v465 = vpack.c.bf16 %v439, %v437
        %v466 = vpack.c.bf16 %v442, %v440
        %v467 = vpack.c.bf16 %v443, %v441
        %v468 = vpack.c.bf16 %v446, %v444
        %v469 = vpack.c.bf16 %v447, %v445
        %v470 = vpack.c.bf16 %v450, %v448
        %v471 = vpack.c.bf16 %v451, %v449
        %v472 = vpack.c.bf16 %v454, %v452
        %v473 = vpack.c.bf16 %v455, %v453
        %v474 = vpack.c.bf16 %v458, %v456
        %v475 = vpack.c.bf16 %v459, %v457
        %v476 = vld [vmem:[%s2] sm:$0xff]
        %v477 = vld [vmem:[%s2 + $0x8] sm:$0xff]
        %v478 = vld [vmem:[%s2 + $0x10] sm:$0xff]
        %v479 = vld [vmem:[%s2 + $0x18] sm:$0xff]
        %v480 = vld [vmem:[%s2 + $0x20] sm:$0xff]
        %v481 = vld [vmem:[%s2 + $0x28] sm:$0xff]
        %v482 = vld [vmem:[%s2 + $0x30] sm:$0xff]
        %v483 = vld [vmem:[%s2 + $0x38] sm:$0xff]
        %v484 = vld [vmem:[%s2 + $0x40] sm:$0xff]
        %v485 = vld [vmem:[%s2 + $0x48] sm:$0xff]
        %v486 = vld [vmem:[%s2 + $0x50] sm:$0xff]
        %v487 = vld [vmem:[%s2 + $0x58] sm:$0xff]
        %v488 = vld [vmem:[%s2 + $0x60] sm:$0xff]
        %v489 = vld [vmem:[%s2 + $0x68] sm:$0xff]
        %v490 = vld [vmem:[%s2 + $0x70] sm:$0xff]
        %v491 = vld [vmem:[%s2 + $0x78] sm:$0xff]
        %v492 = vld [vmem:[%s2 + $0x80] sm:$0xff]
        %v493 = vld [vmem:[%s2 + $0x88] sm:$0xff]
        %v494 = vld [vmem:[%s2 + $0x90] sm:$0xff]
        %v495 = vld [vmem:[%s2 + $0x98] sm:$0xff]
        %v496 = vld [vmem:[%s2 + $0xa0] sm:$0xff]
        %v497 = vld [vmem:[%s2 + $0xa8] sm:$0xff]
        %v498 = vld [vmem:[%s2 + $0xb0] sm:$0xff]
        %v499 = vld [vmem:[%s2 + $0xb8] sm:$0xff]
        %v500 = vld [vmem:[%s2 + $0xc0] sm:$0xff]
        %v501 = vld [vmem:[%s2 + $0xc8] sm:$0xff]
        %v502 = vld [vmem:[%s2 + $0xd0] sm:$0xff]
        %v503 = vld [vmem:[%s2 + $0xd8] sm:$0xff]
        %v504 = vld [vmem:[%s2 + $0xe0] sm:$0xff]
        %v505 = vld [vmem:[%s2 + $0xe8] sm:$0xff]
        %v506 = vld [vmem:[%s2 + $0xf0] sm:$0xff]
        %v507 = vld [vmem:[%s2 + $0xf8] sm:$0xff]
        %v508 = vld [vmem:[%s3] sm:$0x3]
        %v510 = vperm.slane %v508, 0
        %v511 = vperm.slane %v508, 1
        %v546 = vunpack.c.l.b16 %v476
        %v547 = vunpack.c.h.b16 %v476
        %v548 = vunpack.c.l.b16 %v477
        %v549 = vunpack.c.h.b16 %v477
        %v550 = vunpack.c.l.b16 %v478
        %v551 = vunpack.c.h.b16 %v478
        %v552 = vunpack.c.l.b16 %v479
        %v553 = vunpack.c.h.b16 %v479
        %v554 = vunpack.c.l.b16 %v480
        %v555 = vunpack.c.h.b16 %v480
        %v556 = vunpack.c.l.b16 %v481
        %v557 = vunpack.c.h.b16 %v481
        %v558 = vunpack.c.l.b16 %v482
        %v559 = vunpack.c.h.b16 %v482
        %v560 = vunpack.c.l.b16 %v483
        %v561 = vunpack.c.h.b16 %v483
        %v562 = vunpack.c.l.b16 %v484
        %v563 = vunpack.c.h.b16 %v484
        %v564 = vunpack.c.l.b16 %v485
        %v565 = vunpack.c.h.b16 %v485
        %v566 = vunpack.c.l.b16 %v486
        %v567 = vunpack.c.h.b16 %v486
        %v568 = vunpack.c.l.b16 %v487
        %v569 = vunpack.c.h.b16 %v487
        %v570 = vunpack.c.l.b16 %v488
        %v571 = vunpack.c.h.b16 %v488
        %v572 = vunpack.c.l.b16 %v489
        %v573 = vunpack.c.h.b16 %v489
        %v574 = vunpack.c.l.b16 %v490
        %v575 = vunpack.c.h.b16 %v490
        %v576 = vunpack.c.l.b16 %v491
        %v577 = vunpack.c.h.b16 %v491
        %v578 = vunpack.c.l.b16 %v492
        %v579 = vunpack.c.h.b16 %v492
        %v580 = vunpack.c.l.b16 %v493
        %v581 = vunpack.c.h.b16 %v493
        %v582 = vunpack.c.l.b16 %v494
        %v583 = vunpack.c.h.b16 %v494
        %v584 = vunpack.c.l.b16 %v495
        %v585 = vunpack.c.h.b16 %v495
        %v586 = vunpack.c.l.b16 %v496
        %v587 = vunpack.c.h.b16 %v496
        %v588 = vunpack.c.l.b16 %v497
        %v589 = vunpack.c.h.b16 %v497
        %v590 = vunpack.c.l.b16 %v498
        %v591 = vunpack.c.h.b16 %v498
        %v592 = vunpack.c.l.b16 %v499
        %v593 = vunpack.c.h.b16 %v499
        %v594 = vunpack.c.l.b16 %v500
        %v595 = vunpack.c.h.b16 %v500
        %v596 = vunpack.c.l.b16 %v501
        %v597 = vunpack.c.h.b16 %v501
        %v598 = vunpack.c.l.b16 %v502
        %v599 = vunpack.c.h.b16 %v502
        %v600 = vunpack.c.l.b16 %v503
        %v601 = vunpack.c.h.b16 %v503
        %v602 = vunpack.c.l.b16 %v504
        %v603 = vunpack.c.h.b16 %v504
        %v604 = vunpack.c.l.b16 %v505
        %v605 = vunpack.c.h.b16 %v505
        %v606 = vunpack.c.l.b16 %v506
        %v607 = vunpack.c.h.b16 %v506
        %v608 = vunpack.c.l.b16 %v507
        %v609 = vunpack.c.h.b16 %v507
        %v610 = vpack.c.b16 %v548, %v546
        %v611 = vpack.c.b16 %v549, %v547
        %v612 = vpack.c.b16 %v552, %v550
        %v613 = vpack.c.b16 %v553, %v551
        %v614 = vpack.c.b16 %v556, %v554
        %v615 = vpack.c.b16 %v557, %v555
        %v616 = vpack.c.b16 %v560, %v558
        %v617 = vpack.c.b16 %v561, %v559
        %v618 = vpack.c.b16 %v564, %v562
        %v619 = vpack.c.b16 %v565, %v563
        %v620 = vpack.c.b16 %v568, %v566
        %v621 = vpack.c.b16 %v569, %v567
        %v622 = vpack.c.b16 %v572, %v570
        %v623 = vpack.c.b16 %v573, %v571
        %v624 = vpack.c.b16 %v576, %v574
        %v625 = vpack.c.b16 %v577, %v575
        %v626 = vpack.c.b16 %v580, %v578
        %v627 = vpack.c.b16 %v581, %v579
        %v628 = vpack.c.b16 %v584, %v582
        %v629 = vpack.c.b16 %v585, %v583
        %v630 = vpack.c.b16 %v588, %v586
        %v631 = vpack.c.b16 %v589, %v587
        %v632 = vpack.c.b16 %v592, %v590
        %v633 = vpack.c.b16 %v593, %v591
        %v634 = vpack.c.b16 %v596, %v594
        %v635 = vpack.c.b16 %v597, %v595
        %v636 = vpack.c.b16 %v600, %v598
        %v637 = vpack.c.b16 %v601, %v599
        %v638 = vpack.c.b16 %v604, %v602
        %v639 = vpack.c.b16 %v605, %v603
        %v640 = vpack.c.b16 %v608, %v606
        %v641 = vpack.c.b16 %v609, %v607
        %674 = vmatpush.bf16.msra.mxu0 %v624
        %675 = vmatpush.bf16.msra.mxu0 %v622
        %676 = vmatpush.bf16.msra.mxu0 %v620
        %677 = vmatpush.bf16.msra.mxu0 %v618
        %678 = vmatpush.bf16.msra.mxu0 %v616
        %679 = vmatpush.bf16.msra.mxu0 %v614
        %680 = vmatpush.bf16.msra.mxu0 %v612
        %681 = vmatpush.bf16.msra.mxu0 %v610
        %682 = vmatmul.bf16.gmra.mxu0 %v460
        %v683 = vpop.f32.mrf.mxu0
        %v684 = vadd.f32 %v510, %v683
        %v685 = vpop.f32.mrf.mxu0
        %v686 = vadd.f32 %v510, %v685
        %687 = vmatmul.bf16.gmra.mxu0 %v462
        %v688 = vpop.f32.mrf.mxu0
        %v689 = vadd.f32 %v510, %v688
        %v690 = vpop.f32.mrf.mxu0
        %v691 = vadd.f32 %v510, %v690
        %692 = vmatmul.bf16.gmra.mxu0 %v464
        %v693 = vpop.f32.mrf.mxu0
        %v694 = vadd.f32 %v510, %v693
        %v695 = vpop.f32.mrf.mxu0
        %v696 = vadd.f32 %v510, %v695
        %697 = vmatmul.bf16.gmra.mxu0 %v466
        %v698 = vpop.f32.mrf.mxu0
        %v699 = vadd.f32 %v510, %v698
        %v700 = vpop.f32.mrf.mxu0
        %v701 = vadd.f32 %v510, %v700
        %702 = vmatmul.bf16.gmra.mxu0 %v468
        %v703 = vpop.f32.mrf.mxu0
        %v704 = vadd.f32 %v510, %v703
        %v705 = vpop.f32.mrf.mxu0
        %v706 = vadd.f32 %v510, %v705
        %707 = vmatmul.bf16.gmra.mxu0 %v470
        %v708 = vpop.f32.mrf.mxu0
        %v709 = vadd.f32 %v510, %v708
        %v710 = vpop.f32.mrf.mxu0
        %v711 = vadd.f32 %v510, %v710
        %712 = vmatmul.bf16.gmra.mxu0 %v472
        %v713 = vpop.f32.mrf.mxu0
        %v714 = vadd.f32 %v510, %v713
        %v715 = vpop.f32.mrf.mxu0
        %v716 = vadd.f32 %v510, %v715
        %717 = vmatmul.bf16.gmra.mxu0 %v474
        %v718 = vpop.f32.mrf.mxu0
        %v719 = vadd.f32 %v510, %v718
        %v720 = vpop.f32.mrf.mxu0
        %v721 = vadd.f32 %v510, %v720
        %722 = vdwg.mxu0
        %723 = vmatpush.bf16.msra.mxu0 %v640
        %724 = vmatpush.bf16.msra.mxu0 %v638
        %725 = vmatpush.bf16.msra.mxu0 %v636
        %726 = vmatpush.bf16.msra.mxu0 %v634
        %727 = vmatpush.bf16.msra.mxu0 %v632
        %728 = vmatpush.bf16.msra.mxu0 %v630
        %729 = vmatpush.bf16.msra.mxu0 %v628
        %730 = vmatpush.bf16.msra.mxu0 %v626
        %731 = vmatmul.bf16.gmra.mxu0 %v461
        %v732 = vpop.f32.mrf.mxu0
        %v733 = vadd.f32 %v684, %v732
        %v734 = vpop.f32.mrf.mxu0
        %v735 = vadd.f32 %v686, %v734
        %736 = vmatmul.bf16.gmra.mxu0 %v463
        %v737 = vpop.f32.mrf.mxu0
        %v738 = vadd.f32 %v689, %v737
        %v739 = vpop.f32.mrf.mxu0
        %v740 = vadd.f32 %v691, %v739
        %741 = vmatmul.bf16.gmra.mxu0 %v465
        %v742 = vpop.f32.mrf.mxu0
        %v743 = vadd.f32 %v694, %v742
        %v744 = vpop.f32.mrf.mxu0
        %v745 = vadd.f32 %v696, %v744
        %746 = vmatmul.bf16.gmra.mxu0 %v467
        %v747 = vpop.f32.mrf.mxu0
        %v748 = vadd.f32 %v699, %v747
        %v749 = vpop.f32.mrf.mxu0
        %v750 = vadd.f32 %v701, %v749
        %751 = vmatmul.bf16.gmra.mxu0 %v469
        %v752 = vpop.f32.mrf.mxu0
        %v753 = vadd.f32 %v704, %v752
        %v754 = vpop.f32.mrf.mxu0
        %v755 = vadd.f32 %v706, %v754
        %756 = vmatmul.bf16.gmra.mxu0 %v471
        %v757 = vpop.f32.mrf.mxu0
        %v758 = vadd.f32 %v709, %v757
        %v759 = vpop.f32.mrf.mxu0
        %v760 = vadd.f32 %v711, %v759
        %761 = vmatmul.bf16.gmra.mxu0 %v473
        %v762 = vpop.f32.mrf.mxu0
        %v763 = vadd.f32 %v714, %v762
        %v764 = vpop.f32.mrf.mxu0
        %v765 = vadd.f32 %v716, %v764
        %766 = vmatmul.bf16.gmra.mxu0 %v475
        %v767 = vpop.f32.mrf.mxu0
        %v768 = vadd.f32 %v719, %v767
        %v769 = vpop.f32.mrf.mxu0
        %v770 = vadd.f32 %v721, %v769
        %771 = vdwg.mxu0
        %772 = vmatpush.bf16.msra.mxu0 %v625
        %773 = vmatpush.bf16.msra.mxu0 %v623
        %774 = vmatpush.bf16.msra.mxu0 %v621
        %775 = vmatpush.bf16.msra.mxu0 %v619
        %776 = vmatpush.bf16.msra.mxu0 %v617
        %777 = vmatpush.bf16.msra.mxu0 %v615
        %778 = vmatpush.bf16.msra.mxu0 %v613
        %779 = vmatpush.bf16.msra.mxu0 %v611
        %780 = vmatmul.bf16.gmra.mxu0 %v460
        %v781 = vpop.f32.mrf.mxu0
        %v782 = vadd.f32 %v511, %v781
        %v783 = vpop.f32.mrf.mxu0
        %v784 = vadd.f32 %v511, %v783
        %785 = vmatmul.bf16.gmra.mxu0 %v462
        %v786 = vpop.f32.mrf.mxu0
        %v787 = vadd.f32 %v511, %v786
        %v788 = vpop.f32.mrf.mxu0
        %v789 = vadd.f32 %v511, %v788
        %790 = vmatmul.bf16.gmra.mxu0 %v464
        %v791 = vpop.f32.mrf.mxu0
        %v792 = vadd.f32 %v511, %v791
        %v793 = vpop.f32.mrf.mxu0
        %v794 = vadd.f32 %v511, %v793
        %795 = vmatmul.bf16.gmra.mxu0 %v466
        %v796 = vpop.f32.mrf.mxu0
        %v797 = vadd.f32 %v511, %v796
        %v798 = vpop.f32.mrf.mxu0
        %v799 = vadd.f32 %v511, %v798
        %800 = vmatmul.bf16.gmra.mxu0 %v468
        %v801 = vpop.f32.mrf.mxu0
        %v802 = vadd.f32 %v511, %v801
        %v803 = vpop.f32.mrf.mxu0
        %v804 = vadd.f32 %v511, %v803
        %805 = vmatmul.bf16.gmra.mxu0 %v470
        %v806 = vpop.f32.mrf.mxu0
        %v807 = vadd.f32 %v511, %v806
        %v808 = vpop.f32.mrf.mxu0
        %v809 = vadd.f32 %v511, %v808
        %810 = vmatmul.bf16.gmra.mxu0 %v472
        %v811 = vpop.f32.mrf.mxu0
        %v812 = vadd.f32 %v511, %v811
        %v813 = vpop.f32.mrf.mxu0
        %v814 = vadd.f32 %v511, %v813
        %815 = vmatmul.bf16.gmra.mxu0 %v474
        %v816 = vpop.f32.mrf.mxu0
        %v817 = vadd.f32 %v511, %v816
        %v818 = vpop.f32.mrf.mxu0
        %v819 = vadd.f32 %v511, %v818
        %820 = vdwg.mxu0
        %821 = vmatpush.bf16.msra.mxu0 %v641
        %822 = vmatpush.bf16.msra.mxu0 %v639
        %823 = vmatpush.bf16.msra.mxu0 %v637
        %824 = vmatpush.bf16.msra.mxu0 %v635
        %825 = vmatpush.bf16.msra.mxu0 %v633
        %826 = vmatpush.bf16.msra.mxu0 %v631
        %827 = vmatpush.bf16.msra.mxu0 %v629
        %828 = vmatpush.bf16.msra.mxu0 %v627
        %829 = vmatmul.bf16.gmra.mxu0 %v461
        %v830 = vpop.f32.mrf.mxu0
        %v831 = vadd.f32 %v782, %v830
        %v832 = vpop.f32.mrf.mxu0
        %v833 = vadd.f32 %v784, %v832
        %834 = vmatmul.bf16.gmra.mxu0 %v463
        %v835 = vpop.f32.mrf.mxu0
        %v836 = vadd.f32 %v787, %v835
        %v837 = vpop.f32.mrf.mxu0
        %v838 = vadd.f32 %v789, %v837
        %839 = vmatmul.bf16.gmra.mxu0 %v465
        %v840 = vpop.f32.mrf.mxu0
        %v841 = vadd.f32 %v792, %v840
        %v842 = vpop.f32.mrf.mxu0
        %v843 = vadd.f32 %v794, %v842
        %844 = vmatmul.bf16.gmra.mxu0 %v467
        %v845 = vpop.f32.mrf.mxu0
        %v846 = vadd.f32 %v797, %v845
        %v847 = vpop.f32.mrf.mxu0
        %v848 = vadd.f32 %v799, %v847
        %849 = vmatmul.bf16.gmra.mxu0 %v469
        %v850 = vpop.f32.mrf.mxu0
        %v851 = vadd.f32 %v802, %v850
        %v852 = vpop.f32.mrf.mxu0
        %v853 = vadd.f32 %v804, %v852
        %854 = vmatmul.bf16.gmra.mxu0 %v471
        %v855 = vpop.f32.mrf.mxu0
        %v856 = vadd.f32 %v807, %v855
        %v857 = vpop.f32.mrf.mxu0
        %v858 = vadd.f32 %v809, %v857
        %859 = vmatmul.bf16.gmra.mxu0 %v473
        %v860 = vpop.f32.mrf.mxu0
        %v861 = vadd.f32 %v812, %v860
        %v862 = vpop.f32.mrf.mxu0
        %v863 = vadd.f32 %v814, %v862
        %864 = vmatmul.bf16.gmra.mxu0 %v475
        %v865 = vpop.f32.mrf.mxu0
        %v866 = vadd.f32 %v817, %v865
        %v867 = vpop.f32.mrf.mxu0
        %v868 = vadd.f32 %v819, %v867
        %869 = vdwg.mxu0
        %v870 = vmax.f32 %v733, 0.0
        %v871 = vmax.f32 %v831, 0.0
        %v872 = vmax.f32 %v735, 0.0
        %v873 = vmax.f32 %v833, 0.0
        %v874 = vmax.f32 %v738, 0.0
        %v875 = vmax.f32 %v836, 0.0
        %v876 = vmax.f32 %v740, 0.0
        %v877 = vmax.f32 %v838, 0.0
        %v878 = vmax.f32 %v743, 0.0
        %v879 = vmax.f32 %v841, 0.0
        %v880 = vmax.f32 %v745, 0.0
        %v881 = vmax.f32 %v843, 0.0
        %v882 = vmax.f32 %v748, 0.0
        %v883 = vmax.f32 %v846, 0.0
        %v884 = vmax.f32 %v750, 0.0
        %v885 = vmax.f32 %v848, 0.0
        %v886 = vmax.f32 %v753, 0.0
        %v887 = vmax.f32 %v851, 0.0
        %v888 = vmax.f32 %v755, 0.0
        %v889 = vmax.f32 %v853, 0.0
        %v890 = vmax.f32 %v758, 0.0
        %v891 = vmax.f32 %v856, 0.0
        %v892 = vmax.f32 %v760, 0.0
        %v893 = vmax.f32 %v858, 0.0
        %v894 = vmax.f32 %v763, 0.0
        %v895 = vmax.f32 %v861, 0.0
        %v896 = vmax.f32 %v765, 0.0
        %v897 = vmax.f32 %v863, 0.0
        %v898 = vmax.f32 %v768, 0.0
        %v899 = vmax.f32 %v866, 0.0
        %v900 = vmax.f32 %v770, 0.0
        %v901 = vmax.f32 %v868, 0.0
        %v902 = vpack.c.bf16 %v872, %v870
        %v903 = vpack.c.bf16 %v873, %v871
        %v904 = vpack.c.bf16 %v876, %v874
        %v905 = vpack.c.bf16 %v877, %v875
        %v906 = vpack.c.bf16 %v880, %v878
        %v907 = vpack.c.bf16 %v881, %v879
        %v908 = vpack.c.bf16 %v884, %v882
        %v909 = vpack.c.bf16 %v885, %v883
        %v910 = vpack.c.bf16 %v888, %v886
        %v911 = vpack.c.bf16 %v889, %v887
        %v912 = vpack.c.bf16 %v892, %v890
        %v913 = vpack.c.bf16 %v893, %v891
        %v914 = vpack.c.bf16 %v896, %v894
        %v915 = vpack.c.bf16 %v897, %v895
        %v916 = vpack.c.bf16 %v900, %v898
        %v917 = vpack.c.bf16 %v901, %v899
        %v918 = vld [vmem:[%s4] sm:$0xf]
        %v919 = vld [vmem:[%s4 + $0x4] sm:$0xf]
        %v920 = vld [vmem:[%s4 + $0x8] sm:$0xf]
        %v921 = vld [vmem:[%s4 + $0xc] sm:$0xf]
        %v922 = vld [vmem:[%s4 + $0x10] sm:$0xf]
        %v923 = vld [vmem:[%s4 + $0x14] sm:$0xf]
        %v924 = vld [vmem:[%s4 + $0x18] sm:$0xf]
        %v925 = vld [vmem:[%s4 + $0x1c] sm:$0xf]
        %v926 = vld [vmem:[%s4 + $0x20] sm:$0xf]
        %v927 = vld [vmem:[%s4 + $0x24] sm:$0xf]
        %v928 = vld [vmem:[%s4 + $0x28] sm:$0xf]
        %v929 = vld [vmem:[%s4 + $0x2c] sm:$0xf]
        %v930 = vld [vmem:[%s4 + $0x30] sm:$0xf]
        %v931 = vld [vmem:[%s4 + $0x34] sm:$0xf]
        %v932 = vld [vmem:[%s4 + $0x38] sm:$0xf]
        %v933 = vld [vmem:[%s4 + $0x3c] sm:$0xf]
        %v934 = vld [vmem:[%s4 + $0x40] sm:$0xf]
        %v935 = vld [vmem:[%s4 + $0x44] sm:$0xf]
        %v936 = vld [vmem:[%s4 + $0x48] sm:$0xf]
        %v937 = vld [vmem:[%s4 + $0x4c] sm:$0xf]
        %v938 = vld [vmem:[%s4 + $0x50] sm:$0xf]
        %v939 = vld [vmem:[%s4 + $0x54] sm:$0xf]
        %v940 = vld [vmem:[%s4 + $0x58] sm:$0xf]
        %v941 = vld [vmem:[%s4 + $0x5c] sm:$0xf]
        %v942 = vld [vmem:[%s4 + $0x60] sm:$0xf]
        %v943 = vld [vmem:[%s4 + $0x64] sm:$0xf]
        %v944 = vld [vmem:[%s4 + $0x68] sm:$0xf]
        %v945 = vld [vmem:[%s4 + $0x6c] sm:$0xf]
        %v946 = vld [vmem:[%s4 + $0x70] sm:$0xf]
        %v947 = vld [vmem:[%s4 + $0x74] sm:$0xf]
        %v948 = vld [vmem:[%s4 + $0x78] sm:$0xf]
        %v949 = vld [vmem:[%s4 + $0x7c] sm:$0xf]
        %v950 = vld [vmem:[%s5] sm:$0x1]
        %v952 = vperm.slane %v950, 0
        %v986 = vunpack.c.l.b16 %v918
        %v987 = vunpack.c.l.b16 %v919
        %v988 = vunpack.c.l.b16 %v920
        %v989 = vunpack.c.l.b16 %v921
        %v990 = vunpack.c.l.b16 %v922
        %v991 = vunpack.c.l.b16 %v923
        %v992 = vunpack.c.l.b16 %v924
        %v993 = vunpack.c.l.b16 %v925
        %v994 = vunpack.c.l.b16 %v926
        %v995 = vunpack.c.l.b16 %v927
        %v996 = vunpack.c.l.b16 %v928
        %v997 = vunpack.c.l.b16 %v929
        %v998 = vunpack.c.l.b16 %v930
        %v999 = vunpack.c.l.b16 %v931
        %v1000 = vunpack.c.l.b16 %v932
        %v1001 = vunpack.c.l.b16 %v933
        %v1002 = vunpack.c.l.b16 %v934
        %v1003 = vunpack.c.l.b16 %v935
        %v1004 = vunpack.c.l.b16 %v936
        %v1005 = vunpack.c.l.b16 %v937
        %v1006 = vunpack.c.l.b16 %v938
        %v1007 = vunpack.c.l.b16 %v939
        %v1008 = vunpack.c.l.b16 %v940
        %v1009 = vunpack.c.l.b16 %v941
        %v1010 = vunpack.c.l.b16 %v942
        %v1011 = vunpack.c.l.b16 %v943
        %v1012 = vunpack.c.l.b16 %v944
        %v1013 = vunpack.c.l.b16 %v945
        %v1014 = vunpack.c.l.b16 %v946
        %v1015 = vunpack.c.l.b16 %v947
        %v1016 = vunpack.c.l.b16 %v948
        %v1017 = vunpack.c.l.b16 %v949
        %v1018 = vpack.c.b16 %v987, %v986
        %v1019 = vpack.c.b16 %v989, %v988
        %v1020 = vpack.c.b16 %v991, %v990
        %v1021 = vpack.c.b16 %v993, %v992
        %v1022 = vpack.c.b16 %v995, %v994
        %v1023 = vpack.c.b16 %v997, %v996
        %v1024 = vpack.c.b16 %v999, %v998
        %v1025 = vpack.c.b16 %v1001, %v1000
        %v1026 = vpack.c.b16 %v1003, %v1002
        %v1027 = vpack.c.b16 %v1005, %v1004
        %v1028 = vpack.c.b16 %v1007, %v1006
        %v1029 = vpack.c.b16 %v1009, %v1008
        %v1030 = vpack.c.b16 %v1011, %v1010
        %v1031 = vpack.c.b16 %v1013, %v1012
        %v1032 = vpack.c.b16 %v1015, %v1014
        %v1033 = vpack.c.b16 %v1017, %v1016
        %1050 = vmatpush.bf16.msra.mxu0 %v1025
        %1051 = vmatpush.bf16.msra.mxu0 %v1024
        %1052 = vmatpush.bf16.msra.mxu0 %v1023
        %1053 = vmatpush.bf16.msra.mxu0 %v1022
        %1054 = vmatpush.bf16.msra.mxu0 %v1021
        %1055 = vmatpush.bf16.msra.mxu0 %v1020
        %1056 = vmatpush.bf16.msra.mxu0 %v1019
        %1057 = vmatpush.bf16.msra.mxu0 %v1018
        %1058 = vmatmul.bf16.gmra.mxu0 %v902
        %v1059 = vpop.f32.mrf.mxu0
        %v1060 = vadd.f32 %v952, %v1059
        %v1061 = vpop.f32.mrf.mxu0
        %v1062 = vadd.f32 %v952, %v1061
        %1063 = vmatmul.bf16.gmra.mxu0 %v904
        %v1064 = vpop.f32.mrf.mxu0
        %v1065 = vadd.f32 %v952, %v1064
        %v1066 = vpop.f32.mrf.mxu0
        %v1067 = vadd.f32 %v952, %v1066
        %1068 = vmatmul.bf16.gmra.mxu0 %v906
        %v1069 = vpop.f32.mrf.mxu0
        %v1070 = vadd.f32 %v952, %v1069
        %v1071 = vpop.f32.mrf.mxu0
        %v1072 = vadd.f32 %v952, %v1071
        %1073 = vmatmul.bf16.gmra.mxu0 %v908
        %v1074 = vpop.f32.mrf.mxu0
        %v1075 = vadd.f32 %v952, %v1074
        %v1076 = vpop.f32.mrf.mxu0
        %v1077 = vadd.f32 %v952, %v1076
        %1078 = vmatmul.bf16.gmra.mxu0 %v910
        %v1079 = vpop.f32.mrf.mxu0
        %v1080 = vadd.f32 %v952, %v1079
        %v1081 = vpop.f32.mrf.mxu0
        %v1082 = vadd.f32 %v952, %v1081
        %1083 = vmatmul.bf16.gmra.mxu0 %v912
        %v1084 = vpop.f32.mrf.mxu0
        %v1085 = vadd.f32 %v952, %v1084
        %v1086 = vpop.f32.mrf.mxu0
        %v1087 = vadd.f32 %v952, %v1086
        %1088 = vmatmul.bf16.gmra.mxu0 %v914
        %v1089 = vpop.f32.mrf.mxu0
        %v1090 = vadd.f32 %v952, %v1089
        %v1091 = vpop.f32.mrf.mxu0
        %v1092 = vadd.f32 %v952, %v1091
        %1093 = vmatmul.bf16.gmra.mxu0 %v916
        %v1094 = vpop.f32.mrf.mxu0
        %v1095 = vadd.f32 %v952, %v1094
        %v1096 = vpop.f32.mrf.mxu0
        %v1097 = vadd.f32 %v952, %v1096
        %1098 = vdwg.mxu0
        %1099 = vmatpush.bf16.msra.mxu0 %v1033
        %1100 = vmatpush.bf16.msra.mxu0 %v1032
        %1101 = vmatpush.bf16.msra.mxu0 %v1031
        %1102 = vmatpush.bf16.msra.mxu0 %v1030
        %1103 = vmatpush.bf16.msra.mxu0 %v1029
        %1104 = vmatpush.bf16.msra.mxu0 %v1028
        %1105 = vmatpush.bf16.msra.mxu0 %v1027
        %1106 = vmatpush.bf16.msra.mxu0 %v1026
        %1107 = vmatmul.bf16.gmra.mxu0 %v903
        %v1108 = vpop.f32.mrf.mxu0
        %v1109 = vadd.f32 %v1060, %v1108
        %v1110 = vpop.f32.mrf.mxu0
        %v1111 = vadd.f32 %v1062, %v1110
        %1112 = vmatmul.bf16.gmra.mxu0 %v905
        %v1113 = vpop.f32.mrf.mxu0
        %v1114 = vadd.f32 %v1065, %v1113
        %v1115 = vpop.f32.mrf.mxu0
        %v1116 = vadd.f32 %v1067, %v1115
        %1117 = vmatmul.bf16.gmra.mxu0 %v907
        %v1118 = vpop.f32.mrf.mxu0
        %v1119 = vadd.f32 %v1070, %v1118
        %v1120 = vpop.f32.mrf.mxu0
        %v1121 = vadd.f32 %v1072, %v1120
        %1122 = vmatmul.bf16.gmra.mxu0 %v909
        %v1123 = vpop.f32.mrf.mxu0
        %v1124 = vadd.f32 %v1075, %v1123
        %v1125 = vpop.f32.mrf.mxu0
        %v1126 = vadd.f32 %v1077, %v1125
        %1127 = vmatmul.bf16.gmra.mxu0 %v911
        %v1128 = vpop.f32.mrf.mxu0
        %v1129 = vadd.f32 %v1080, %v1128
        %v1130 = vpop.f32.mrf.mxu0
        %v1131 = vadd.f32 %v1082, %v1130
        %1132 = vmatmul.bf16.gmra.mxu0 %v913
        %v1133 = vpop.f32.mrf.mxu0
        %v1134 = vadd.f32 %v1085, %v1133
        %v1135 = vpop.f32.mrf.mxu0
        %v1136 = vadd.f32 %v1087, %v1135
        %1137 = vmatmul.bf16.gmra.mxu0 %v915
        %v1138 = vpop.f32.mrf.mxu0
        %v1139 = vadd.f32 %v1090, %v1138
        %v1140 = vpop.f32.mrf.mxu0
        %v1141 = vadd.f32 %v1092, %v1140
        %1142 = vmatmul.bf16.gmra.mxu0 %v917
        %v1143 = vpop.f32.mrf.mxu0
        %v1144 = vadd.f32 %v1095, %v1143
        %v1145 = vpop.f32.mrf.mxu0
        %v1146 = vadd.f32 %v1097, %v1145
        %1147 = vdwg.mxu0
        %v1148 = vld [vmem:[%s418] sm:$0xff]
        %v1149 = vld [vmem:[%s418 + $0x8] sm:$0xff]
        %v1150 = vld [vmem:[%s418 + $0x10] sm:$0xff]
        %v1151 = vld [vmem:[%s418 + $0x18] sm:$0xff]
        %v1152 = vld [vmem:[%s418 + $0x20] sm:$0xff]
        %v1153 = vld [vmem:[%s418 + $0x28] sm:$0xff]
        %v1154 = vld [vmem:[%s418 + $0x30] sm:$0xff]
        %v1155 = vld [vmem:[%s418 + $0x38] sm:$0xff]
        %v1156 = vld [vmem:[%s418 + $0x40] sm:$0xff]
        %v1157 = vld [vmem:[%s418 + $0x48] sm:$0xff]
        %v1158 = vld [vmem:[%s418 + $0x50] sm:$0xff]
        %v1159 = vld [vmem:[%s418 + $0x58] sm:$0xff]
        %v1160 = vld [vmem:[%s418 + $0x60] sm:$0xff]
        %v1161 = vld [vmem:[%s418 + $0x68] sm:$0xff]
        %v1162 = vld [vmem:[%s418 + $0x70] sm:$0xff]
        %v1163 = vld [vmem:[%s418 + $0x78] sm:$0xff]
        %1180 = vrot.lane.b32.xlu0 %v1148, 64
        %v1181 = vpop.permute.xlu0 %1180
        %1182 = vrot.lane.b32.xlu0 %v1149, 64
        %v1183 = vpop.permute.xlu0 %1182
        %1184 = vrot.lane.b32.xlu0 %v1150, 64
        %v1185 = vpop.permute.xlu0 %1184
        %1186 = vrot.lane.b32.xlu0 %v1151, 64
        %v1187 = vpop.permute.xlu0 %1186
        %1188 = vrot.lane.b32.xlu0 %v1152, 64
        %v1189 = vpop.permute.xlu0 %1188
        %1190 = vrot.lane.b32.xlu0 %v1153, 64
        %v1191 = vpop.permute.xlu0 %1190
        %1192 = vrot.lane.b32.xlu0 %v1154, 64
        %v1193 = vpop.permute.xlu0 %1192
        %1194 = vrot.lane.b32.xlu0 %v1155, 64
        %v1195 = vpop.permute.xlu0 %1194
        %1196 = vrot.lane.b32.xlu0 %v1156, 64
        %v1197 = vpop.permute.xlu0 %1196
        %1198 = vrot.lane.b32.xlu0 %v1157, 64
        %v1199 = vpop.permute.xlu0 %1198
        %1200 = vrot.lane.b32.xlu0 %v1158, 64
        %v1201 = vpop.permute.xlu0 %1200
        %1202 = vrot.lane.b32.xlu0 %v1159, 64
        %v1203 = vpop.permute.xlu0 %1202
        %1204 = vrot.lane.b32.xlu0 %v1160, 64
        %v1205 = vpop.permute.xlu0 %1204
        %1206 = vrot.lane.b32.xlu0 %v1161, 64
        %v1207 = vpop.permute.xlu0 %1206
        %1208 = vrot.lane.b32.xlu0 %v1162, 64
        %v1209 = vpop.permute.xlu0 %1208
        %1210 = vrot.lane.b32.xlu0 %v1163, 64
        %v1211 = vpop.permute.xlu0 %1210
        %v1228 = vmul.f32 %v1109, %v1181
        %v1229 = vmul.f32 %v1111, %v1183
        %v1230 = vmul.f32 %v1114, %v1185
        %v1231 = vmul.f32 %v1116, %v1187
        %v1232 = vmul.f32 %v1119, %v1189
        %v1233 = vmul.f32 %v1121, %v1191
        %v1234 = vmul.f32 %v1124, %v1193
        %v1235 = vmul.f32 %v1126, %v1195
        %v1236 = vmul.f32 %v1129, %v1197
        %v1237 = vmul.f32 %v1131, %v1199
        %v1238 = vmul.f32 %v1134, %v1201
        %v1239 = vmul.f32 %v1136, %v1203
        %v1240 = vmul.f32 %v1139, %v1205
        %v1241 = vmul.f32 %v1141, %v1207
        %v1242 = vmul.f32 %v1144, %v1209
        %v1243 = vmul.f32 %v1146, %v1211
        %1260 = vrot.lane.b32.xlu0 %v1228, 64
        %v1261 = vpop.permute.xlu0 %1260
        %1262 = vrot.lane.b32.xlu0 %v1229, 64
        %v1263 = vpop.permute.xlu0 %1262
        %1264 = vrot.lane.b32.xlu0 %v1230, 64
        %v1265 = vpop.permute.xlu0 %1264
        %1266 = vrot.lane.b32.xlu0 %v1231, 64
        %v1267 = vpop.permute.xlu0 %1266
        %1268 = vrot.lane.b32.xlu0 %v1232, 64
        %v1269 = vpop.permute.xlu0 %1268
        %1270 = vrot.lane.b32.xlu0 %v1233, 64
        %v1271 = vpop.permute.xlu0 %1270
        %1272 = vrot.lane.b32.xlu0 %v1234, 64
        %v1273 = vpop.permute.xlu0 %1272
        %1274 = vrot.lane.b32.xlu0 %v1235, 64
        %v1275 = vpop.permute.xlu0 %1274
        %1276 = vrot.lane.b32.xlu0 %v1236, 64
        %v1277 = vpop.permute.xlu0 %1276
        %1278 = vrot.lane.b32.xlu0 %v1237, 64
        %v1279 = vpop.permute.xlu0 %1278
        %1280 = vrot.lane.b32.xlu0 %v1238, 64
        %v1281 = vpop.permute.xlu0 %1280
        %1282 = vrot.lane.b32.xlu0 %v1239, 64
        %v1283 = vpop.permute.xlu0 %1282
        %1284 = vrot.lane.b32.xlu0 %v1240, 64
        %v1285 = vpop.permute.xlu0 %1284
        %1286 = vrot.lane.b32.xlu0 %v1241, 64
        %v1287 = vpop.permute.xlu0 %1286
        %1288 = vrot.lane.b32.xlu0 %v1242, 64
        %v1289 = vpop.permute.xlu0 %1288
        %1290 = vrot.lane.b32.xlu0 %v1243, 64
        %v1291 = vpop.permute.xlu0 %1290
        %v1308 = vadd.f32 %v1109, %v1261
        %v1309 = vadd.f32 %v1111, %v1263
        %v1310 = vadd.f32 %v1114, %v1265
        %v1311 = vadd.f32 %v1116, %v1267
        %v1312 = vadd.f32 %v1119, %v1269
        %v1313 = vadd.f32 %v1121, %v1271
        %v1314 = vadd.f32 %v1124, %v1273
        %v1315 = vadd.f32 %v1126, %v1275
        %v1316 = vadd.f32 %v1129, %v1277
        %v1317 = vadd.f32 %v1131, %v1279
        %v1318 = vadd.f32 %v1134, %v1281
        %v1319 = vadd.f32 %v1136, %v1283
        %v1320 = vadd.f32 %v1139, %v1285
        %v1321 = vadd.f32 %v1141, %v1287
        %v1322 = vadd.f32 %v1144, %v1289
        %v1323 = vadd.f32 %v1146, %v1291
        %v1324 = vpack.c.bf16 %v1309, %v1308
        %v1325 = vpack.c.bf16 %v1311, %v1310
        %v1326 = vpack.c.bf16 %v1313, %v1312
        %v1327 = vpack.c.bf16 %v1315, %v1314
        %v1328 = vpack.c.bf16 %v1317, %v1316
        %v1329 = vpack.c.bf16 %v1319, %v1318
        %v1330 = vpack.c.bf16 %v1321, %v1320
        %v1331 = vpack.c.bf16 %v1323, %v1322
        %v1332 = vld [vmem:[%s6] sm:$0xff]
        %v1333 = vld [vmem:[%s6 + $0x8] sm:$0xff]
        %v1334 = vld [vmem:[%s6 + $0x10] sm:$0xff]
        %v1335 = vld [vmem:[%s6 + $0x18] sm:$0xff]
        %v1336 = vld [vmem:[%s6 + $0x20] sm:$0xff]
        %v1337 = vld [vmem:[%s6 + $0x28] sm:$0xff]
        %v1338 = vld [vmem:[%s6 + $0x30] sm:$0xff]
        %v1339 = vld [vmem:[%s6 + $0x38] sm:$0xff]
        %v1340 = vld [vmem:[%s7] sm:$0x3]
        %v1342 = vperm.slane %v1340, 0
        %v1343 = vperm.slane %v1340, 1
        %v1354 = vunpack.c.l.b16 %v1332
        %v1355 = vunpack.c.h.b16 %v1332
        %v1356 = vunpack.c.l.b16 %v1333
        %v1357 = vunpack.c.h.b16 %v1333
        %v1358 = vunpack.c.l.b16 %v1334
        %v1359 = vunpack.c.h.b16 %v1334
        %v1360 = vunpack.c.l.b16 %v1335
        %v1361 = vunpack.c.h.b16 %v1335
        %v1362 = vunpack.c.l.b16 %v1336
        %v1363 = vunpack.c.h.b16 %v1336
        %v1364 = vunpack.c.l.b16 %v1337
        %v1365 = vunpack.c.h.b16 %v1337
        %v1366 = vunpack.c.l.b16 %v1338
        %v1367 = vunpack.c.h.b16 %v1338
        %v1368 = vunpack.c.l.b16 %v1339
        %v1369 = vunpack.c.h.b16 %v1339
        %v1370 = vpack.c.b16 %v1356, %v1354
        %v1371 = vpack.c.b16 %v1357, %v1355
        %v1372 = vpack.c.b16 %v1360, %v1358
        %v1373 = vpack.c.b16 %v1361, %v1359
        %v1374 = vpack.c.b16 %v1364, %v1362
        %v1375 = vpack.c.b16 %v1365, %v1363
        %v1376 = vpack.c.b16 %v1368, %v1366
        %v1377 = vpack.c.b16 %v1369, %v1367
        %vm1386 = vcmask 523264
        %v1388 = vsel %vm1386, %v1324, 0
        %v1391 = vsel %vm1386, %v1325, 0
        %v1394 = vsel %vm1386, %v1326, 0
        %v1397 = vsel %vm1386, %v1327, 0
        %v1400 = vsel %vm1386, %v1328, 0
        %v1403 = vsel %vm1386, %v1329, 0
        %v1406 = vsel %vm1386, %v1330, 0
        %v1409 = vsel %vm1386, %v1331, 0
        %1411 = vmatpush.bf16.msra.mxu0 0
        %1412 = vmatpush.bf16.msra.mxu0 0
        %1413 = vmatpush.bf16.msra.mxu0 0
        %1414 = vmatpush.bf16.msra.mxu0 0
        %1415 = vmatpush.bf16.msra.mxu0 %v1376
        %1416 = vmatpush.bf16.msra.mxu0 %v1374
        %1417 = vmatpush.bf16.msra.mxu0 %v1372
        %1418 = vmatpush.bf16.msra.mxu0 %v1370
        %1419 = vmatmul.bf16.gmra.mxu0 %v1388
        %v1420 = vpop.f32.mrf.mxu0
        %v1421 = vadd.f32 %v1342, %v1420
        %v1422 = vpop.f32.mrf.mxu0
        %v1423 = vadd.f32 %v1342, %v1422
        %1424 = vmatmul.bf16.gmra.mxu0 %v1391
        %v1425 = vpop.f32.mrf.mxu0
        %v1426 = vadd.f32 %v1342, %v1425
        %v1427 = vpop.f32.mrf.mxu0
        %v1428 = vadd.f32 %v1342, %v1427
        %1429 = vmatmul.bf16.gmra.mxu0 %v1394
        %v1430 = vpop.f32.mrf.mxu0
        %v1431 = vadd.f32 %v1342, %v1430
        %v1432 = vpop.f32.mrf.mxu0
        %v1433 = vadd.f32 %v1342, %v1432
        %1434 = vmatmul.bf16.gmra.mxu0 %v1397
        %v1435 = vpop.f32.mrf.mxu0
        %v1436 = vadd.f32 %v1342, %v1435
        %v1437 = vpop.f32.mrf.mxu0
        %v1438 = vadd.f32 %v1342, %v1437
        %1439 = vmatmul.bf16.gmra.mxu0 %v1400
        %v1440 = vpop.f32.mrf.mxu0
        %v1441 = vadd.f32 %v1342, %v1440
        %v1442 = vpop.f32.mrf.mxu0
        %v1443 = vadd.f32 %v1342, %v1442
        %1444 = vmatmul.bf16.gmra.mxu0 %v1403
        %v1445 = vpop.f32.mrf.mxu0
        %v1446 = vadd.f32 %v1342, %v1445
        %v1447 = vpop.f32.mrf.mxu0
        %v1448 = vadd.f32 %v1342, %v1447
        %1449 = vmatmul.bf16.gmra.mxu0 %v1406
        %v1450 = vpop.f32.mrf.mxu0
        %v1451 = vadd.f32 %v1342, %v1450
        %v1452 = vpop.f32.mrf.mxu0
        %v1453 = vadd.f32 %v1342, %v1452
        %1454 = vmatmul.bf16.gmra.mxu0 %v1409
        %v1455 = vpop.f32.mrf.mxu0
        %v1456 = vadd.f32 %v1342, %v1455
        %v1457 = vpop.f32.mrf.mxu0
        %v1458 = vadd.f32 %v1342, %v1457
        %1459 = vdwg.mxu0
        %1460 = vmatpush.bf16.msra.mxu0 0
        %1461 = vmatpush.bf16.msra.mxu0 0
        %1462 = vmatpush.bf16.msra.mxu0 0
        %1463 = vmatpush.bf16.msra.mxu0 0
        %1464 = vmatpush.bf16.msra.mxu0 %v1377
        %1465 = vmatpush.bf16.msra.mxu0 %v1375
        %1466 = vmatpush.bf16.msra.mxu0 %v1373
        %1467 = vmatpush.bf16.msra.mxu0 %v1371
        %1468 = vmatmul.bf16.gmra.mxu0 %v1388
        %v1469 = vpop.f32.mrf.mxu0
        %v1470 = vadd.f32 %v1343, %v1469
        %v1471 = vpop.f32.mrf.mxu0
        %v1472 = vadd.f32 %v1343, %v1471
        %1473 = vmatmul.bf16.gmra.mxu0 %v1391
        %v1474 = vpop.f32.mrf.mxu0
        %v1475 = vadd.f32 %v1343, %v1474
        %v1476 = vpop.f32.mrf.mxu0
        %v1477 = vadd.f32 %v1343, %v1476
        %1478 = vmatmul.bf16.gmra.mxu0 %v1394
        %v1479 = vpop.f32.mrf.mxu0
        %v1480 = vadd.f32 %v1343, %v1479
        %v1481 = vpop.f32.mrf.mxu0
        %v1482 = vadd.f32 %v1343, %v1481
        %1483 = vmatmul.bf16.gmra.mxu0 %v1397
        %v1484 = vpop.f32.mrf.mxu0
        %v1485 = vadd.f32 %v1343, %v1484
        %v1486 = vpop.f32.mrf.mxu0
        %v1487 = vadd.f32 %v1343, %v1486
        %1488 = vmatmul.bf16.gmra.mxu0 %v1400
        %v1489 = vpop.f32.mrf.mxu0
        %v1490 = vadd.f32 %v1343, %v1489
        %v1491 = vpop.f32.mrf.mxu0
        %v1492 = vadd.f32 %v1343, %v1491
        %1493 = vmatmul.bf16.gmra.mxu0 %v1403
        %v1494 = vpop.f32.mrf.mxu0
        %v1495 = vadd.f32 %v1343, %v1494
        %v1496 = vpop.f32.mrf.mxu0
        %v1497 = vadd.f32 %v1343, %v1496
        %1498 = vmatmul.bf16.gmra.mxu0 %v1406
        %v1499 = vpop.f32.mrf.mxu0
        %v1500 = vadd.f32 %v1343, %v1499
        %v1501 = vpop.f32.mrf.mxu0
        %v1502 = vadd.f32 %v1343, %v1501
        %1503 = vmatmul.bf16.gmra.mxu0 %v1409
        %v1504 = vpop.f32.mrf.mxu0
        %v1505 = vadd.f32 %v1343, %v1504
        %v1506 = vpop.f32.mrf.mxu0
        %v1507 = vadd.f32 %v1343, %v1506
        %1508 = vdwg.mxu0
        %v1509 = vmax.f32 %v1421, 0.0
        %v1510 = vmax.f32 %v1470, 0.0
        %v1511 = vmax.f32 %v1423, 0.0
        %v1512 = vmax.f32 %v1472, 0.0
        %v1513 = vmax.f32 %v1426, 0.0
        %v1514 = vmax.f32 %v1475, 0.0
        %v1515 = vmax.f32 %v1428, 0.0
        %v1516 = vmax.f32 %v1477, 0.0
        %v1517 = vmax.f32 %v1431, 0.0
        %v1518 = vmax.f32 %v1480, 0.0
        %v1519 = vmax.f32 %v1433, 0.0
        %v1520 = vmax.f32 %v1482, 0.0
        %v1521 = vmax.f32 %v1436, 0.0
        %v1522 = vmax.f32 %v1485, 0.0
        %v1523 = vmax.f32 %v1438, 0.0
        %v1524 = vmax.f32 %v1487, 0.0
        %v1525 = vmax.f32 %v1441, 0.0
        %v1526 = vmax.f32 %v1490, 0.0
        %v1527 = vmax.f32 %v1443, 0.0
        %v1528 = vmax.f32 %v1492, 0.0
        %v1529 = vmax.f32 %v1446, 0.0
        %v1530 = vmax.f32 %v1495, 0.0
        %v1531 = vmax.f32 %v1448, 0.0
        %v1532 = vmax.f32 %v1497, 0.0
        %v1533 = vmax.f32 %v1451, 0.0
        %v1534 = vmax.f32 %v1500, 0.0
        %v1535 = vmax.f32 %v1453, 0.0
        %v1536 = vmax.f32 %v1502, 0.0
        %v1537 = vmax.f32 %v1456, 0.0
        %v1538 = vmax.f32 %v1505, 0.0
        %v1539 = vmax.f32 %v1458, 0.0
        %v1540 = vmax.f32 %v1507, 0.0
        %v1541 = vpack.c.bf16 %v1511, %v1509
        %v1542 = vpack.c.bf16 %v1512, %v1510
        %v1543 = vpack.c.bf16 %v1515, %v1513
        %v1544 = vpack.c.bf16 %v1516, %v1514
        %v1545 = vpack.c.bf16 %v1519, %v1517
        %v1546 = vpack.c.bf16 %v1520, %v1518
        %v1547 = vpack.c.bf16 %v1523, %v1521
        %v1548 = vpack.c.bf16 %v1524, %v1522
        %v1549 = vpack.c.bf16 %v1527, %v1525
        %v1550 = vpack.c.bf16 %v1528, %v1526
        %v1551 = vpack.c.bf16 %v1531, %v1529
        %v1552 = vpack.c.bf16 %v1532, %v1530
        %v1553 = vpack.c.bf16 %v1535, %v1533
        %v1554 = vpack.c.bf16 %v1536, %v1534
        %v1555 = vpack.c.bf16 %v1539, %v1537
        %v1556 = vpack.c.bf16 %v1540, %v1538
        %v1557 = vld [vmem:[%s8] sm:$0xff]
        %v1558 = vld [vmem:[%s8 + $0x8] sm:$0xff]
        %v1559 = vld [vmem:[%s8 + $0x10] sm:$0xff]
        %v1560 = vld [vmem:[%s8 + $0x18] sm:$0xff]
        %v1561 = vld [vmem:[%s8 + $0x20] sm:$0xff]
        %v1562 = vld [vmem:[%s8 + $0x28] sm:$0xff]
        %v1563 = vld [vmem:[%s8 + $0x30] sm:$0xff]
        %v1564 = vld [vmem:[%s8 + $0x38] sm:$0xff]
        %v1565 = vld [vmem:[%s8 + $0x40] sm:$0xff]
        %v1566 = vld [vmem:[%s8 + $0x48] sm:$0xff]
        %v1567 = vld [vmem:[%s8 + $0x50] sm:$0xff]
        %v1568 = vld [vmem:[%s8 + $0x58] sm:$0xff]
        %v1569 = vld [vmem:[%s8 + $0x60] sm:$0xff]
        %v1570 = vld [vmem:[%s8 + $0x68] sm:$0xff]
        %v1571 = vld [vmem:[%s8 + $0x70] sm:$0xff]
        %v1572 = vld [vmem:[%s8 + $0x78] sm:$0xff]
        %v1573 = vld [vmem:[%s8 + $0x80] sm:$0xff]
        %v1574 = vld [vmem:[%s8 + $0x88] sm:$0xff]
        %v1575 = vld [vmem:[%s8 + $0x90] sm:$0xff]
        %v1576 = vld [vmem:[%s8 + $0x98] sm:$0xff]
        %v1577 = vld [vmem:[%s8 + $0xa0] sm:$0xff]
        %v1578 = vld [vmem:[%s8 + $0xa8] sm:$0xff]
        %v1579 = vld [vmem:[%s8 + $0xb0] sm:$0xff]
        %v1580 = vld [vmem:[%s8 + $0xb8] sm:$0xff]
        %v1581 = vld [vmem:[%s8 + $0xc0] sm:$0xff]
        %v1582 = vld [vmem:[%s8 + $0xc8] sm:$0xff]
        %v1583 = vld [vmem:[%s8 + $0xd0] sm:$0xff]
        %v1584 = vld [vmem:[%s8 + $0xd8] sm:$0xff]
        %v1585 = vld [vmem:[%s8 + $0xe0] sm:$0xff]
        %v1586 = vld [vmem:[%s8 + $0xe8] sm:$0xff]
        %v1587 = vld [vmem:[%s8 + $0xf0] sm:$0xff]
        %v1588 = vld [vmem:[%s8 + $0xf8] sm:$0xff]
        %v1589 = vld [vmem:[%s9] sm:$0x3]
        %v1591 = vperm.slane %v1589, 0
        %v1592 = vperm.slane %v1589, 1
        %v1627 = vunpack.c.l.b16 %v1557
        %v1628 = vunpack.c.h.b16 %v1557
        %v1629 = vunpack.c.l.b16 %v1558
        %v1630 = vunpack.c.h.b16 %v1558
        %v1631 = vunpack.c.l.b16 %v1559
        %v1632 = vunpack.c.h.b16 %v1559
        %v1633 = vunpack.c.l.b16 %v1560
        %v1634 = vunpack.c.h.b16 %v1560
        %v1635 = vunpack.c.l.b16 %v1561
        %v1636 = vunpack.c.h.b16 %v1561
        %v1637 = vunpack.c.l.b16 %v1562
        %v1638 = vunpack.c.h.b16 %v1562
        %v1639 = vunpack.c.l.b16 %v1563
        %v1640 = vunpack.c.h.b16 %v1563
        %v1641 = vunpack.c.l.b16 %v1564
        %v1642 = vunpack.c.h.b16 %v1564
        %v1643 = vunpack.c.l.b16 %v1565
        %v1644 = vunpack.c.h.b16 %v1565
        %v1645 = vunpack.c.l.b16 %v1566
        %v1646 = vunpack.c.h.b16 %v1566
        %v1647 = vunpack.c.l.b16 %v1567
        %v1648 = vunpack.c.h.b16 %v1567
        %v1649 = vunpack.c.l.b16 %v1568
        %v1650 = vunpack.c.h.b16 %v1568
        %v1651 = vunpack.c.l.b16 %v1569
        %v1652 = vunpack.c.h.b16 %v1569
        %v1653 = vunpack.c.l.b16 %v1570
        %v1654 = vunpack.c.h.b16 %v1570
        %v1655 = vunpack.c.l.b16 %v1571
        %v1656 = vunpack.c.h.b16 %v1571
        %v1657 = vunpack.c.l.b16 %v1572
        %v1658 = vunpack.c.h.b16 %v1572
        %v1659 = vunpack.c.l.b16 %v1573
        %v1660 = vunpack.c.h.b16 %v1573
        %v1661 = vunpack.c.l.b16 %v1574
        %v1662 = vunpack.c.h.b16 %v1574
        %v1663 = vunpack.c.l.b16 %v1575
        %v1664 = vunpack.c.h.b16 %v1575
        %v1665 = vunpack.c.l.b16 %v1576
        %v1666 = vunpack.c.h.b16 %v1576
        %v1667 = vunpack.c.l.b16 %v1577
        %v1668 = vunpack.c.h.b16 %v1577
        %v1669 = vunpack.c.l.b16 %v1578
        %v1670 = vunpack.c.h.b16 %v1578
        %v1671 = vunpack.c.l.b16 %v1579
        %v1672 = vunpack.c.h.b16 %v1579
        %v1673 = vunpack.c.l.b16 %v1580
        %v1674 = vunpack.c.h.b16 %v1580
        %v1675 = vunpack.c.l.b16 %v1581
        %v1676 = vunpack.c.h.b16 %v1581
        %v1677 = vunpack.c.l.b16 %v1582
        %v1678 = vunpack.c.h.b16 %v1582
        %v1679 = vunpack.c.l.b16 %v1583
        %v1680 = vunpack.c.h.b16 %v1583
        %v1681 = vunpack.c.l.b16 %v1584
        %v1682 = vunpack.c.h.b16 %v1584
        %v1683 = vunpack.c.l.b16 %v1585
        %v1684 = vunpack.c.h.b16 %v1585
        %v1685 = vunpack.c.l.b16 %v1586
        %v1686 = vunpack.c.h.b16 %v1586
        %v1687 = vunpack.c.l.b16 %v1587
        %v1688 = vunpack.c.h.b16 %v1587
        %v1689 = vunpack.c.l.b16 %v1588
        %v1690 = vunpack.c.h.b16 %v1588
        %v1691 = vpack.c.b16 %v1629, %v1627
        %v1692 = vpack.c.b16 %v1630, %v1628
        %v1693 = vpack.c.b16 %v1633, %v1631
        %v1694 = vpack.c.b16 %v1634, %v1632
        %v1695 = vpack.c.b16 %v1637, %v1635
        %v1696 = vpack.c.b16 %v1638, %v1636
        %v1697 = vpack.c.b16 %v1641, %v1639
        %v1698 = vpack.c.b16 %v1642, %v1640
        %v1699 = vpack.c.b16 %v1645, %v1643
        %v1700 = vpack.c.b16 %v1646, %v1644
        %v1701 = vpack.c.b16 %v1649, %v1647
        %v1702 = vpack.c.b16 %v1650, %v1648
        %v1703 = vpack.c.b16 %v1653, %v1651
        %v1704 = vpack.c.b16 %v1654, %v1652
        %v1705 = vpack.c.b16 %v1657, %v1655
        %v1706 = vpack.c.b16 %v1658, %v1656
        %v1707 = vpack.c.b16 %v1661, %v1659
        %v1708 = vpack.c.b16 %v1662, %v1660
        %v1709 = vpack.c.b16 %v1665, %v1663
        %v1710 = vpack.c.b16 %v1666, %v1664
        %v1711 = vpack.c.b16 %v1669, %v1667
        %v1712 = vpack.c.b16 %v1670, %v1668
        %v1713 = vpack.c.b16 %v1673, %v1671
        %v1714 = vpack.c.b16 %v1674, %v1672
        %v1715 = vpack.c.b16 %v1677, %v1675
        %v1716 = vpack.c.b16 %v1678, %v1676
        %v1717 = vpack.c.b16 %v1681, %v1679
        %v1718 = vpack.c.b16 %v1682, %v1680
        %v1719 = vpack.c.b16 %v1685, %v1683
        %v1720 = vpack.c.b16 %v1686, %v1684
        %v1721 = vpack.c.b16 %v1689, %v1687
        %v1722 = vpack.c.b16 %v1690, %v1688
        %1755 = vmatpush.bf16.msra.mxu0 %v1705
        %1756 = vmatpush.bf16.msra.mxu0 %v1703
        %1757 = vmatpush.bf16.msra.mxu0 %v1701
        %1758 = vmatpush.bf16.msra.mxu0 %v1699
        %1759 = vmatpush.bf16.msra.mxu0 %v1697
        %1760 = vmatpush.bf16.msra.mxu0 %v1695
        %1761 = vmatpush.bf16.msra.mxu0 %v1693
        %1762 = vmatpush.bf16.msra.mxu0 %v1691
        %1763 = vmatmul.bf16.gmra.mxu0 %v1541
        %v1764 = vpop.f32.mrf.mxu0
        %v1765 = vadd.f32 %v1591, %v1764
        %v1766 = vpop.f32.mrf.mxu0
        %v1767 = vadd.f32 %v1591, %v1766
        %1768 = vmatmul.bf16.gmra.mxu0 %v1543
        %v1769 = vpop.f32.mrf.mxu0
        %v1770 = vadd.f32 %v1591, %v1769
        %v1771 = vpop.f32.mrf.mxu0
        %v1772 = vadd.f32 %v1591, %v1771
        %1773 = vmatmul.bf16.gmra.mxu0 %v1545
        %v1774 = vpop.f32.mrf.mxu0
        %v1775 = vadd.f32 %v1591, %v1774
        %v1776 = vpop.f32.mrf.mxu0
        %v1777 = vadd.f32 %v1591, %v1776
        %1778 = vmatmul.bf16.gmra.mxu0 %v1547
        %v1779 = vpop.f32.mrf.mxu0
        %v1780 = vadd.f32 %v1591, %v1779
        %v1781 = vpop.f32.mrf.mxu0
        %v1782 = vadd.f32 %v1591, %v1781
        %1783 = vmatmul.bf16.gmra.mxu0 %v1549
        %v1784 = vpop.f32.mrf.mxu0
        %v1785 = vadd.f32 %v1591, %v1784
        %v1786 = vpop.f32.mrf.mxu0
        %v1787 = vadd.f32 %v1591, %v1786
        %1788 = vmatmul.bf16.gmra.mxu0 %v1551
        %v1789 = vpop.f32.mrf.mxu0
        %v1790 = vadd.f32 %v1591, %v1789
        %v1791 = vpop.f32.mrf.mxu0
        %v1792 = vadd.f32 %v1591, %v1791
        %1793 = vmatmul.bf16.gmra.mxu0 %v1553
        %v1794 = vpop.f32.mrf.mxu0
        %v1795 = vadd.f32 %v1591, %v1794
        %v1796 = vpop.f32.mrf.mxu0
        %v1797 = vadd.f32 %v1591, %v1796
        %1798 = vmatmul.bf16.gmra.mxu0 %v1555
        %v1799 = vpop.f32.mrf.mxu0
        %v1800 = vadd.f32 %v1591, %v1799
        %v1801 = vpop.f32.mrf.mxu0
        %v1802 = vadd.f32 %v1591, %v1801
        %1803 = vdwg.mxu0
        %1804 = vmatpush.bf16.msra.mxu0 %v1721
        %1805 = vmatpush.bf16.msra.mxu0 %v1719
        %1806 = vmatpush.bf16.msra.mxu0 %v1717
        %1807 = vmatpush.bf16.msra.mxu0 %v1715
        %1808 = vmatpush.bf16.msra.mxu0 %v1713
        %1809 = vmatpush.bf16.msra.mxu0 %v1711
        %1810 = vmatpush.bf16.msra.mxu0 %v1709
        %1811 = vmatpush.bf16.msra.mxu0 %v1707
        %1812 = vmatmul.bf16.gmra.mxu0 %v1542
        %v1813 = vpop.f32.mrf.mxu0
        %v1814 = vadd.f32 %v1765, %v1813
        %v1815 = vpop.f32.mrf.mxu0
        %v1816 = vadd.f32 %v1767, %v1815
        %1817 = vmatmul.bf16.gmra.mxu0 %v1544
        %v1818 = vpop.f32.mrf.mxu0
        %v1819 = vadd.f32 %v1770, %v1818
        %v1820 = vpop.f32.mrf.mxu0
        %v1821 = vadd.f32 %v1772, %v1820
        %1822 = vmatmul.bf16.gmra.mxu0 %v1546
        %v1823 = vpop.f32.mrf.mxu0
        %v1824 = vadd.f32 %v1775, %v1823
        %v1825 = vpop.f32.mrf.mxu0
        %v1826 = vadd.f32 %v1777, %v1825
        %1827 = vmatmul.bf16.gmra.mxu0 %v1548
        %v1828 = vpop.f32.mrf.mxu0
        %v1829 = vadd.f32 %v1780, %v1828
        %v1830 = vpop.f32.mrf.mxu0
        %v1831 = vadd.f32 %v1782, %v1830
        %1832 = vmatmul.bf16.gmra.mxu0 %v1550
        %v1833 = vpop.f32.mrf.mxu0
        %v1834 = vadd.f32 %v1785, %v1833
        %v1835 = vpop.f32.mrf.mxu0
        %v1836 = vadd.f32 %v1787, %v1835
        %1837 = vmatmul.bf16.gmra.mxu0 %v1552
        %v1838 = vpop.f32.mrf.mxu0
        %v1839 = vadd.f32 %v1790, %v1838
        %v1840 = vpop.f32.mrf.mxu0
        %v1841 = vadd.f32 %v1792, %v1840
        %1842 = vmatmul.bf16.gmra.mxu0 %v1554
        %v1843 = vpop.f32.mrf.mxu0
        %v1844 = vadd.f32 %v1795, %v1843
        %v1845 = vpop.f32.mrf.mxu0
        %v1846 = vadd.f32 %v1797, %v1845
        %1847 = vmatmul.bf16.gmra.mxu0 %v1556
        %v1848 = vpop.f32.mrf.mxu0
        %v1849 = vadd.f32 %v1800, %v1848
        %v1850 = vpop.f32.mrf.mxu0
        %v1851 = vadd.f32 %v1802, %v1850
        %1852 = vdwg.mxu0
        %1853 = vmatpush.bf16.msra.mxu0 %v1706
        %1854 = vmatpush.bf16.msra.mxu0 %v1704
        %1855 = vmatpush.bf16.msra.mxu0 %v1702
        %1856 = vmatpush.bf16.msra.mxu0 %v1700
        %1857 = vmatpush.bf16.msra.mxu0 %v1698
        %1858 = vmatpush.bf16.msra.mxu0 %v1696
        %1859 = vmatpush.bf16.msra.mxu0 %v1694
        %1860 = vmatpush.bf16.msra.mxu0 %v1692
        %1861 = vmatmul.bf16.gmra.mxu0 %v1541
        %v1862 = vpop.f32.mrf.mxu0
        %v1863 = vadd.f32 %v1592, %v1862
        %v1864 = vpop.f32.mrf.mxu0
        %v1865 = vadd.f32 %v1592, %v1864
        %1866 = vmatmul.bf16.gmra.mxu0 %v1543
        %v1867 = vpop.f32.mrf.mxu0
        %v1868 = vadd.f32 %v1592, %v1867
        %v1869 = vpop.f32.mrf.mxu0
        %v1870 = vadd.f32 %v1592, %v1869
        %1871 = vmatmul.bf16.gmra.mxu0 %v1545
        %v1872 = vpop.f32.mrf.mxu0
        %v1873 = vadd.f32 %v1592, %v1872
        %v1874 = vpop.f32.mrf.mxu0
        %v1875 = vadd.f32 %v1592, %v1874
        %1876 = vmatmul.bf16.gmra.mxu0 %v1547
        %v1877 = vpop.f32.mrf.mxu0
        %v1878 = vadd.f32 %v1592, %v1877
        %v1879 = vpop.f32.mrf.mxu0
        %v1880 = vadd.f32 %v1592, %v1879
        %1881 = vmatmul.bf16.gmra.mxu0 %v1549
        %v1882 = vpop.f32.mrf.mxu0
        %v1883 = vadd.f32 %v1592, %v1882
        %v1884 = vpop.f32.mrf.mxu0
        %v1885 = vadd.f32 %v1592, %v1884
        %1886 = vmatmul.bf16.gmra.mxu0 %v1551
        %v1887 = vpop.f32.mrf.mxu0
        %v1888 = vadd.f32 %v1592, %v1887
        %v1889 = vpop.f32.mrf.mxu0
        %v1890 = vadd.f32 %v1592, %v1889
        %1891 = vmatmul.bf16.gmra.mxu0 %v1553
        %v1892 = vpop.f32.mrf.mxu0
        %v1893 = vadd.f32 %v1592, %v1892
        %v1894 = vpop.f32.mrf.mxu0
        %v1895 = vadd.f32 %v1592, %v1894
        %1896 = vmatmul.bf16.gmra.mxu0 %v1555
        %v1897 = vpop.f32.mrf.mxu0
        %v1898 = vadd.f32 %v1592, %v1897
        %v1899 = vpop.f32.mrf.mxu0
        %v1900 = vadd.f32 %v1592, %v1899
        %1901 = vdwg.mxu0
        %1902 = vmatpush.bf16.msra.mxu0 %v1722
        %1903 = vmatpush.bf16.msra.mxu0 %v1720
        %1904 = vmatpush.bf16.msra.mxu0 %v1718
        %1905 = vmatpush.bf16.msra.mxu0 %v1716
        %1906 = vmatpush.bf16.msra.mxu0 %v1714
        %1907 = vmatpush.bf16.msra.mxu0 %v1712
        %1908 = vmatpush.bf16.msra.mxu0 %v1710
        %1909 = vmatpush.bf16.msra.mxu0 %v1708
        %1910 = vmatmul.bf16.gmra.mxu0 %v1542
        %v1911 = vpop.f32.mrf.mxu0
        %v1912 = vadd.f32 %v1863, %v1911
        %v1913 = vpop.f32.mrf.mxu0
        %v1914 = vadd.f32 %v1865, %v1913
        %1915 = vmatmul.bf16.gmra.mxu0 %v1544
        %v1916 = vpop.f32.mrf.mxu0
        %v1917 = vadd.f32 %v1868, %v1916
        %v1918 = vpop.f32.mrf.mxu0
        %v1919 = vadd.f32 %v1870, %v1918
        %1920 = vmatmul.bf16.gmra.mxu0 %v1546
        %v1921 = vpop.f32.mrf.mxu0
        %v1922 = vadd.f32 %v1873, %v1921
        %v1923 = vpop.f32.mrf.mxu0
        %v1924 = vadd.f32 %v1875, %v1923
        %1925 = vmatmul.bf16.gmra.mxu0 %v1548
        %v1926 = vpop.f32.mrf.mxu0
        %v1927 = vadd.f32 %v1878, %v1926
        %v1928 = vpop.f32.mrf.mxu0
        %v1929 = vadd.f32 %v1880, %v1928
        %1930 = vmatmul.bf16.gmra.mxu0 %v1550
        %v1931 = vpop.f32.mrf.mxu0
        %v1932 = vadd.f32 %v1883, %v1931
        %v1933 = vpop.f32.mrf.mxu0
        %v1934 = vadd.f32 %v1885, %v1933
        %1935 = vmatmul.bf16.gmra.mxu0 %v1552
        %v1936 = vpop.f32.mrf.mxu0
        %v1937 = vadd.f32 %v1888, %v1936
        %v1938 = vpop.f32.mrf.mxu0
        %v1939 = vadd.f32 %v1890, %v1938
        %1940 = vmatmul.bf16.gmra.mxu0 %v1554
        %v1941 = vpop.f32.mrf.mxu0
        %v1942 = vadd.f32 %v1893, %v1941
        %v1943 = vpop.f32.mrf.mxu0
        %v1944 = vadd.f32 %v1895, %v1943
        %1945 = vmatmul.bf16.gmra.mxu0 %v1556
        %v1946 = vpop.f32.mrf.mxu0
        %v1947 = vadd.f32 %v1898, %v1946
        %v1948 = vpop.f32.mrf.mxu0
        %v1949 = vadd.f32 %v1900, %v1948
        %1950 = vdwg.mxu0
        %v1951 = vxor.u32 %v1814, 2147483648
        %v1952 = vxor.u32 %v1912, 2147483648
        %v1953 = vxor.u32 %v1816, 2147483648
        %v1954 = vxor.u32 %v1914, 2147483648
        %v1955 = vxor.u32 %v1819, 2147483648
        %v1956 = vxor.u32 %v1917, 2147483648
        %v1957 = vxor.u32 %v1821, 2147483648
        %v1958 = vxor.u32 %v1919, 2147483648
        %v1959 = vxor.u32 %v1824, 2147483648
        %v1960 = vxor.u32 %v1922, 2147483648
        %v1961 = vxor.u32 %v1826, 2147483648
        %v1962 = vxor.u32 %v1924, 2147483648
        %v1963 = vxor.u32 %v1829, 2147483648
        %v1964 = vxor.u32 %v1927, 2147483648
        %v1965 = vxor.u32 %v1831, 2147483648
        %v1966 = vxor.u32 %v1929, 2147483648
        %v1967 = vxor.u32 %v1834, 2147483648
        %v1968 = vxor.u32 %v1932, 2147483648
        %v1969 = vxor.u32 %v1836, 2147483648
        %v1970 = vxor.u32 %v1934, 2147483648
        %v1971 = vxor.u32 %v1839, 2147483648
        %v1972 = vxor.u32 %v1937, 2147483648
        %v1973 = vxor.u32 %v1841, 2147483648
        %v1974 = vxor.u32 %v1939, 2147483648
        %v1975 = vxor.u32 %v1844, 2147483648
        %v1976 = vxor.u32 %v1942, 2147483648
        %v1977 = vxor.u32 %v1846, 2147483648
        %v1978 = vxor.u32 %v1944, 2147483648
        %v1979 = vxor.u32 %v1849, 2147483648
        %v1980 = vxor.u32 %v1947, 2147483648
        %v1981 = vxor.u32 %v1851, 2147483648
        %v1982 = vxor.u32 %v1949, 2147483648
        %v1983 = vmul.f32 %v1951, 1.442695
        %v1984 = vpow.pop %v1983
        %v1985 = vmul.f32 %v1952, 1.442695
        %v1986 = vpow.pop %v1985
        %v1987 = vmul.f32 %v1953, 1.442695
        %v1988 = vpow.pop %v1987
        %v1989 = vmul.f32 %v1954, 1.442695
        %v1990 = vpow.pop %v1989
        %v1991 = vmul.f32 %v1955, 1.442695
        %v1992 = vpow.pop %v1991
        %v1993 = vmul.f32 %v1956, 1.442695
        %v1994 = vpow.pop %v1993
        %v1995 = vmul.f32 %v1957, 1.442695
        %v1996 = vpow.pop %v1995
        %v1997 = vmul.f32 %v1958, 1.442695
        %v1998 = vpow.pop %v1997
        %v1999 = vmul.f32 %v1959, 1.442695
        %v2000 = vpow.pop %v1999
        %v2001 = vmul.f32 %v1960, 1.442695
        %v2002 = vpow.pop %v2001
        %v2003 = vmul.f32 %v1961, 1.442695
        %v2004 = vpow.pop %v2003
        %v2005 = vmul.f32 %v1962, 1.442695
        %v2006 = vpow.pop %v2005
        %v2007 = vmul.f32 %v1963, 1.442695
        %v2008 = vpow.pop %v2007
        %v2009 = vmul.f32 %v1964, 1.442695
        %v2010 = vpow.pop %v2009
        %v2011 = vmul.f32 %v1965, 1.442695
        %v2012 = vpow.pop %v2011
        %v2013 = vmul.f32 %v1966, 1.442695
        %v2014 = vpow.pop %v2013
        %v2015 = vmul.f32 %v1967, 1.442695
        %v2016 = vpow.pop %v2015
        %v2017 = vmul.f32 %v1968, 1.442695
        %v2018 = vpow.pop %v2017
        %v2019 = vmul.f32 %v1969, 1.442695
        %v2020 = vpow.pop %v2019
        %v2021 = vmul.f32 %v1970, 1.442695
        %v2022 = vpow.pop %v2021
        %v2023 = vmul.f32 %v1971, 1.442695
        %v2024 = vpow.pop %v2023
        %v2025 = vmul.f32 %v1972, 1.442695
        %v2026 = vpow.pop %v2025
        %v2027 = vmul.f32 %v1973, 1.442695
        %v2028 = vpow.pop %v2027
        %v2029 = vmul.f32 %v1974, 1.442695
        %v2030 = vpow.pop %v2029
        %v2031 = vmul.f32 %v1975, 1.442695
        %v2032 = vpow.pop %v2031
        %v2033 = vmul.f32 %v1976, 1.442695
        %v2034 = vpow.pop %v2033
        %v2035 = vmul.f32 %v1977, 1.442695
        %v2036 = vpow.pop %v2035
        %v2037 = vmul.f32 %v1978, 1.442695
        %v2038 = vpow.pop %v2037
        %v2039 = vmul.f32 %v1979, 1.442695
        %v2040 = vpow.pop %v2039
        %v2041 = vmul.f32 %v1980, 1.442695
        %v2042 = vpow.pop %v2041
        %v2043 = vmul.f32 %v1981, 1.442695
        %v2044 = vpow.pop %v2043
        %v2045 = vmul.f32 %v1982, 1.442695
        %v2046 = vpow.pop %v2045
        %v2047 = vadd.f32 %v1984, 1.0
        %v2048 = vadd.f32 %v1986, 1.0
        %v2049 = vadd.f32 %v1988, 1.0
        %v2050 = vadd.f32 %v1990, 1.0
        %v2051 = vadd.f32 %v1992, 1.0
        %v2052 = vadd.f32 %v1994, 1.0
        %v2053 = vadd.f32 %v1996, 1.0
        %v2054 = vadd.f32 %v1998, 1.0
        %v2055 = vadd.f32 %v2000, 1.0
        %v2056 = vadd.f32 %v2002, 1.0
        %v2057 = vadd.f32 %v2004, 1.0
        %v2058 = vadd.f32 %v2006, 1.0
        %v2059 = vadd.f32 %v2008, 1.0
        %v2060 = vadd.f32 %v2010, 1.0
        %v2061 = vadd.f32 %v2012, 1.0
        %v2062 = vadd.f32 %v2014, 1.0
        %v2063 = vadd.f32 %v2016, 1.0
        %v2064 = vadd.f32 %v2018, 1.0
        %v2065 = vadd.f32 %v2020, 1.0
        %v2066 = vadd.f32 %v2022, 1.0
        %v2067 = vadd.f32 %v2024, 1.0
        %v2068 = vadd.f32 %v2026, 1.0
        %v2069 = vadd.f32 %v2028, 1.0
        %v2070 = vadd.f32 %v2030, 1.0
        %v2071 = vadd.f32 %v2032, 1.0
        %v2072 = vadd.f32 %v2034, 1.0
        %v2073 = vadd.f32 %v2036, 1.0
        %v2074 = vadd.f32 %v2038, 1.0
        %v2075 = vadd.f32 %v2040, 1.0
        %v2076 = vadd.f32 %v2042, 1.0
        %v2077 = vadd.f32 %v2044, 1.0
        %v2078 = vadd.f32 %v2046, 1.0
        %v2079 = vrcp.pop %v2047
        %v2080 = vmul.f32 %v2047, %v2079
        %v2081 = vsub.f32 1.0, %v2080
        %v2082 = vmul.f32 %v2079, %v2081
        %v2083 = vadd.f32 %v2079, %v2082
        %vm2084 = vweird.f32 %v2047
        %vm2085 = vweird.f32 %v2079
        %vm2086 = vmor %vm2084, %vm2085
        %v2087 = vsel %vm2086, %v2079, %v2083
        %v2088 = vand.u32 2147483647, %v2047
        %vm2089 = vcmp.eq.f32.partialorder %v2088, 8.507059e+37
        %v2090 = vand.u32 %v2047, 2147483648
        %v2091 = vor.u32 1.1754944e-38, %v2090
        %v2092 = vsel %vm2089, %v2091, %v2087
        %v2093 = vmul.f32 1.0, %v2092
        %v2094 = vrcp.pop %v2048
        %v2095 = vmul.f32 %v2048, %v2094
        %v2096 = vsub.f32 1.0, %v2095
        %v2097 = vmul.f32 %v2094, %v2096
        %v2098 = vadd.f32 %v2094, %v2097
        %vm2099 = vweird.f32 %v2048
        %vm2100 = vweird.f32 %v2094
        %vm2101 = vmor %vm2099, %vm2100
        %v2102 = vsel %vm2101, %v2094, %v2098
        %v2103 = vand.u32 2147483647, %v2048
        %vm2104 = vcmp.eq.f32.partialorder %v2103, 8.507059e+37
        %v2105 = vand.u32 %v2048, 2147483648
        %v2106 = vor.u32 1.1754944e-38, %v2105
        %v2107 = vsel %vm2104, %v2106, %v2102
        %v2108 = vmul.f32 1.0, %v2107
        %v2109 = vrcp.pop %v2049
        %v2110 = vmul.f32 %v2049, %v2109
        %v2111 = vsub.f32 1.0, %v2110
        %v2112 = vmul.f32 %v2109, %v2111
        %v2113 = vadd.f32 %v2109, %v2112
        %vm2114 = vweird.f32 %v2049
        %vm2115 = vweird.f32 %v2109
        %vm2116 = vmor %vm2114, %vm2115
        %v2117 = vsel %vm2116, %v2109, %v2113
        %v2118 = vand.u32 2147483647, %v2049
        %vm2119 = vcmp.eq.f32.partialorder %v2118, 8.507059e+37
        %v2120 = vand.u32 %v2049, 2147483648
        %v2121 = vor.u32 1.1754944e-38, %v2120
        %v2122 = vsel %vm2119, %v2121, %v2117
        %v2123 = vmul.f32 1.0, %v2122
        %v2124 = vrcp.pop %v2050
        %v2125 = vmul.f32 %v2050, %v2124
        %v2126 = vsub.f32 1.0, %v2125
        %v2127 = vmul.f32 %v2124, %v2126
        %v2128 = vadd.f32 %v2124, %v2127
        %vm2129 = vweird.f32 %v2050
        %vm2130 = vweird.f32 %v2124
        %vm2131 = vmor %vm2129, %vm2130
        %v2132 = vsel %vm2131, %v2124, %v2128
        %v2133 = vand.u32 2147483647, %v2050
        %vm2134 = vcmp.eq.f32.partialorder %v2133, 8.507059e+37
        %v2135 = vand.u32 %v2050, 2147483648
        %v2136 = vor.u32 1.1754944e-38, %v2135
        %v2137 = vsel %vm2134, %v2136, %v2132
        %v2138 = vmul.f32 1.0, %v2137
        %v2139 = vrcp.pop %v2051
        %v2140 = vmul.f32 %v2051, %v2139
        %v2141 = vsub.f32 1.0, %v2140
        %v2142 = vmul.f32 %v2139, %v2141
        %v2143 = vadd.f32 %v2139, %v2142
        %vm2144 = vweird.f32 %v2051
        %vm2145 = vweird.f32 %v2139
        %vm2146 = vmor %vm2144, %vm2145
        %v2147 = vsel %vm2146, %v2139, %v2143
        %v2148 = vand.u32 2147483647, %v2051
        %vm2149 = vcmp.eq.f32.partialorder %v2148, 8.507059e+37
        %v2150 = vand.u32 %v2051, 2147483648
        %v2151 = vor.u32 1.1754944e-38, %v2150
        %v2152 = vsel %vm2149, %v2151, %v2147
        %v2153 = vmul.f32 1.0, %v2152
        %v2154 = vrcp.pop %v2052
        %v2155 = vmul.f32 %v2052, %v2154
        %v2156 = vsub.f32 1.0, %v2155
        %v2157 = vmul.f32 %v2154, %v2156
        %v2158 = vadd.f32 %v2154, %v2157
        %vm2159 = vweird.f32 %v2052
        %vm2160 = vweird.f32 %v2154
        %vm2161 = vmor %vm2159, %vm2160
        %v2162 = vsel %vm2161, %v2154, %v2158
        %v2163 = vand.u32 2147483647, %v2052
        %vm2164 = vcmp.eq.f32.partialorder %v2163, 8.507059e+37
        %v2165 = vand.u32 %v2052, 2147483648
        %v2166 = vor.u32 1.1754944e-38, %v2165
        %v2167 = vsel %vm2164, %v2166, %v2162
        %v2168 = vmul.f32 1.0, %v2167
        %v2169 = vrcp.pop %v2053
        %v2170 = vmul.f32 %v2053, %v2169
        %v2171 = vsub.f32 1.0, %v2170
        %v2172 = vmul.f32 %v2169, %v2171
        %v2173 = vadd.f32 %v2169, %v2172
        %vm2174 = vweird.f32 %v2053
        %vm2175 = vweird.f32 %v2169
        %vm2176 = vmor %vm2174, %vm2175
        %v2177 = vsel %vm2176, %v2169, %v2173
        %v2178 = vand.u32 2147483647, %v2053
        %vm2179 = vcmp.eq.f32.partialorder %v2178, 8.507059e+37
        %v2180 = vand.u32 %v2053, 2147483648
        %v2181 = vor.u32 1.1754944e-38, %v2180
        %v2182 = vsel %vm2179, %v2181, %v2177
        %v2183 = vmul.f32 1.0, %v2182
        %v2184 = vrcp.pop %v2054
        %v2185 = vmul.f32 %v2054, %v2184
        %v2186 = vsub.f32 1.0, %v2185
        %v2187 = vmul.f32 %v2184, %v2186
        %v2188 = vadd.f32 %v2184, %v2187
        %vm2189 = vweird.f32 %v2054
        %vm2190 = vweird.f32 %v2184
        %vm2191 = vmor %vm2189, %vm2190
        %v2192 = vsel %vm2191, %v2184, %v2188
        %v2193 = vand.u32 2147483647, %v2054
        %vm2194 = vcmp.eq.f32.partialorder %v2193, 8.507059e+37
        %v2195 = vand.u32 %v2054, 2147483648
        %v2196 = vor.u32 1.1754944e-38, %v2195
        %v2197 = vsel %vm2194, %v2196, %v2192
        %v2198 = vmul.f32 1.0, %v2197
        %v2199 = vrcp.pop %v2055
        %v2200 = vmul.f32 %v2055, %v2199
        %v2201 = vsub.f32 1.0, %v2200
        %v2202 = vmul.f32 %v2199, %v2201
        %v2203 = vadd.f32 %v2199, %v2202
        %vm2204 = vweird.f32 %v2055
        %vm2205 = vweird.f32 %v2199
        %vm2206 = vmor %vm2204, %vm2205
        %v2207 = vsel %vm2206, %v2199, %v2203
        %v2208 = vand.u32 2147483647, %v2055
        %vm2209 = vcmp.eq.f32.partialorder %v2208, 8.507059e+37
        %v2210 = vand.u32 %v2055, 2147483648
        %v2211 = vor.u32 1.1754944e-38, %v2210
        %v2212 = vsel %vm2209, %v2211, %v2207
        %v2213 = vmul.f32 1.0, %v2212
        %v2214 = vrcp.pop %v2056
        %v2215 = vmul.f32 %v2056, %v2214
        %v2216 = vsub.f32 1.0, %v2215
        %v2217 = vmul.f32 %v2214, %v2216
        %v2218 = vadd.f32 %v2214, %v2217
        %vm2219 = vweird.f32 %v2056
        %vm2220 = vweird.f32 %v2214
        %vm2221 = vmor %vm2219, %vm2220
        %v2222 = vsel %vm2221, %v2214, %v2218
        %v2223 = vand.u32 2147483647, %v2056
        %vm2224 = vcmp.eq.f32.partialorder %v2223, 8.507059e+37
        %v2225 = vand.u32 %v2056, 2147483648
        %v2226 = vor.u32 1.1754944e-38, %v2225
        %v2227 = vsel %vm2224, %v2226, %v2222
        %v2228 = vmul.f32 1.0, %v2227
        %v2229 = vrcp.pop %v2057
        %v2230 = vmul.f32 %v2057, %v2229
        %v2231 = vsub.f32 1.0, %v2230
        %v2232 = vmul.f32 %v2229, %v2231
        %v2233 = vadd.f32 %v2229, %v2232
        %vm2234 = vweird.f32 %v2057
        %vm2235 = vweird.f32 %v2229
        %vm2236 = vmor %vm2234, %vm2235
        %v2237 = vsel %vm2236, %v2229, %v2233
        %v2238 = vand.u32 2147483647, %v2057
        %vm2239 = vcmp.eq.f32.partialorder %v2238, 8.507059e+37
        %v2240 = vand.u32 %v2057, 2147483648
        %v2241 = vor.u32 1.1754944e-38, %v2240
        %v2242 = vsel %vm2239, %v2241, %v2237
        %v2243 = vmul.f32 1.0, %v2242
        %v2244 = vrcp.pop %v2058
        %v2245 = vmul.f32 %v2058, %v2244
        %v2246 = vsub.f32 1.0, %v2245
        %v2247 = vmul.f32 %v2244, %v2246
        %v2248 = vadd.f32 %v2244, %v2247
        %vm2249 = vweird.f32 %v2058
        %vm2250 = vweird.f32 %v2244
        %vm2251 = vmor %vm2249, %vm2250
        %v2252 = vsel %vm2251, %v2244, %v2248
        %v2253 = vand.u32 2147483647, %v2058
        %vm2254 = vcmp.eq.f32.partialorder %v2253, 8.507059e+37
        %v2255 = vand.u32 %v2058, 2147483648
        %v2256 = vor.u32 1.1754944e-38, %v2255
        %v2257 = vsel %vm2254, %v2256, %v2252
        %v2258 = vmul.f32 1.0, %v2257
        %v2259 = vrcp.pop %v2059
        %v2260 = vmul.f32 %v2059, %v2259
        %v2261 = vsub.f32 1.0, %v2260
        %v2262 = vmul.f32 %v2259, %v2261
        %v2263 = vadd.f32 %v2259, %v2262
        %vm2264 = vweird.f32 %v2059
        %vm2265 = vweird.f32 %v2259
        %vm2266 = vmor %vm2264, %vm2265
        %v2267 = vsel %vm2266, %v2259, %v2263
        %v2268 = vand.u32 2147483647, %v2059
        %vm2269 = vcmp.eq.f32.partialorder %v2268, 8.507059e+37
        %v2270 = vand.u32 %v2059, 2147483648
        %v2271 = vor.u32 1.1754944e-38, %v2270
        %v2272 = vsel %vm2269, %v2271, %v2267
        %v2273 = vmul.f32 1.0, %v2272
        %v2274 = vrcp.pop %v2060
        %v2275 = vmul.f32 %v2060, %v2274
        %v2276 = vsub.f32 1.0, %v2275
        %v2277 = vmul.f32 %v2274, %v2276
        %v2278 = vadd.f32 %v2274, %v2277
        %vm2279 = vweird.f32 %v2060
        %vm2280 = vweird.f32 %v2274
        %vm2281 = vmor %vm2279, %vm2280
        %v2282 = vsel %vm2281, %v2274, %v2278
        %v2283 = vand.u32 2147483647, %v2060
        %vm2284 = vcmp.eq.f32.partialorder %v2283, 8.507059e+37
        %v2285 = vand.u32 %v2060, 2147483648
        %v2286 = vor.u32 1.1754944e-38, %v2285
        %v2287 = vsel %vm2284, %v2286, %v2282
        %v2288 = vmul.f32 1.0, %v2287
        %v2289 = vrcp.pop %v2061
        %v2290 = vmul.f32 %v2061, %v2289
        %v2291 = vsub.f32 1.0, %v2290
        %v2292 = vmul.f32 %v2289, %v2291
        %v2293 = vadd.f32 %v2289, %v2292
        %vm2294 = vweird.f32 %v2061
        %vm2295 = vweird.f32 %v2289
        %vm2296 = vmor %vm2294, %vm2295
        %v2297 = vsel %vm2296, %v2289, %v2293
        %v2298 = vand.u32 2147483647, %v2061
        %vm2299 = vcmp.eq.f32.partialorder %v2298, 8.507059e+37
        %v2300 = vand.u32 %v2061, 2147483648
        %v2301 = vor.u32 1.1754944e-38, %v2300
        %v2302 = vsel %vm2299, %v2301, %v2297
        %v2303 = vmul.f32 1.0, %v2302
        %v2304 = vrcp.pop %v2062
        %v2305 = vmul.f32 %v2062, %v2304
        %v2306 = vsub.f32 1.0, %v2305
        %v2307 = vmul.f32 %v2304, %v2306
        %v2308 = vadd.f32 %v2304, %v2307
        %vm2309 = vweird.f32 %v2062
        %vm2310 = vweird.f32 %v2304
        %vm2311 = vmor %vm2309, %vm2310
        %v2312 = vsel %vm2311, %v2304, %v2308
        %v2313 = vand.u32 2147483647, %v2062
        %vm2314 = vcmp.eq.f32.partialorder %v2313, 8.507059e+37
        %v2315 = vand.u32 %v2062, 2147483648
        %v2316 = vor.u32 1.1754944e-38, %v2315
        %v2317 = vsel %vm2314, %v2316, %v2312
        %v2318 = vmul.f32 1.0, %v2317
        %v2319 = vrcp.pop %v2063
        %v2320 = vmul.f32 %v2063, %v2319
        %v2321 = vsub.f32 1.0, %v2320
        %v2322 = vmul.f32 %v2319, %v2321
        %v2323 = vadd.f32 %v2319, %v2322
        %vm2324 = vweird.f32 %v2063
        %vm2325 = vweird.f32 %v2319
        %vm2326 = vmor %vm2324, %vm2325
        %v2327 = vsel %vm2326, %v2319, %v2323
        %v2328 = vand.u32 2147483647, %v2063
        %vm2329 = vcmp.eq.f32.partialorder %v2328, 8.507059e+37
        %v2330 = vand.u32 %v2063, 2147483648
        %v2331 = vor.u32 1.1754944e-38, %v2330
        %v2332 = vsel %vm2329, %v2331, %v2327
        %v2333 = vmul.f32 1.0, %v2332
        %v2334 = vrcp.pop %v2064
        %v2335 = vmul.f32 %v2064, %v2334
        %v2336 = vsub.f32 1.0, %v2335
        %v2337 = vmul.f32 %v2334, %v2336
        %v2338 = vadd.f32 %v2334, %v2337
        %vm2339 = vweird.f32 %v2064
        %vm2340 = vweird.f32 %v2334
        %vm2341 = vmor %vm2339, %vm2340
        %v2342 = vsel %vm2341, %v2334, %v2338
        %v2343 = vand.u32 2147483647, %v2064
        %vm2344 = vcmp.eq.f32.partialorder %v2343, 8.507059e+37
        %v2345 = vand.u32 %v2064, 2147483648
        %v2346 = vor.u32 1.1754944e-38, %v2345
        %v2347 = vsel %vm2344, %v2346, %v2342
        %v2348 = vmul.f32 1.0, %v2347
        %v2349 = vrcp.pop %v2065
        %v2350 = vmul.f32 %v2065, %v2349
        %v2351 = vsub.f32 1.0, %v2350
        %v2352 = vmul.f32 %v2349, %v2351
        %v2353 = vadd.f32 %v2349, %v2352
        %vm2354 = vweird.f32 %v2065
        %vm2355 = vweird.f32 %v2349
        %vm2356 = vmor %vm2354, %vm2355
        %v2357 = vsel %vm2356, %v2349, %v2353
        %v2358 = vand.u32 2147483647, %v2065
        %vm2359 = vcmp.eq.f32.partialorder %v2358, 8.507059e+37
        %v2360 = vand.u32 %v2065, 2147483648
        %v2361 = vor.u32 1.1754944e-38, %v2360
        %v2362 = vsel %vm2359, %v2361, %v2357
        %v2363 = vmul.f32 1.0, %v2362
        %v2364 = vrcp.pop %v2066
        %v2365 = vmul.f32 %v2066, %v2364
        %v2366 = vsub.f32 1.0, %v2365
        %v2367 = vmul.f32 %v2364, %v2366
        %v2368 = vadd.f32 %v2364, %v2367
        %vm2369 = vweird.f32 %v2066
        %vm2370 = vweird.f32 %v2364
        %vm2371 = vmor %vm2369, %vm2370
        %v2372 = vsel %vm2371, %v2364, %v2368
        %v2373 = vand.u32 2147483647, %v2066
        %vm2374 = vcmp.eq.f32.partialorder %v2373, 8.507059e+37
        %v2375 = vand.u32 %v2066, 2147483648
        %v2376 = vor.u32 1.1754944e-38, %v2375
        %v2377 = vsel %vm2374, %v2376, %v2372
        %v2378 = vmul.f32 1.0, %v2377
        %v2379 = vrcp.pop %v2067
        %v2380 = vmul.f32 %v2067, %v2379
        %v2381 = vsub.f32 1.0, %v2380
        %v2382 = vmul.f32 %v2379, %v2381
        %v2383 = vadd.f32 %v2379, %v2382
        %vm2384 = vweird.f32 %v2067
        %vm2385 = vweird.f32 %v2379
        %vm2386 = vmor %vm2384, %vm2385
        %v2387 = vsel %vm2386, %v2379, %v2383
        %v2388 = vand.u32 2147483647, %v2067
        %vm2389 = vcmp.eq.f32.partialorder %v2388, 8.507059e+37
        %v2390 = vand.u32 %v2067, 2147483648
        %v2391 = vor.u32 1.1754944e-38, %v2390
        %v2392 = vsel %vm2389, %v2391, %v2387
        %v2393 = vmul.f32 1.0, %v2392
        %v2394 = vrcp.pop %v2068
        %v2395 = vmul.f32 %v2068, %v2394
        %v2396 = vsub.f32 1.0, %v2395
        %v2397 = vmul.f32 %v2394, %v2396
        %v2398 = vadd.f32 %v2394, %v2397
        %vm2399 = vweird.f32 %v2068
        %vm2400 = vweird.f32 %v2394
        %vm2401 = vmor %vm2399, %vm2400
        %v2402 = vsel %vm2401, %v2394, %v2398
        %v2403 = vand.u32 2147483647, %v2068
        %vm2404 = vcmp.eq.f32.partialorder %v2403, 8.507059e+37
        %v2405 = vand.u32 %v2068, 2147483648
        %v2406 = vor.u32 1.1754944e-38, %v2405
        %v2407 = vsel %vm2404, %v2406, %v2402
        %v2408 = vmul.f32 1.0, %v2407
        %v2409 = vrcp.pop %v2069
        %v2410 = vmul.f32 %v2069, %v2409
        %v2411 = vsub.f32 1.0, %v2410
        %v2412 = vmul.f32 %v2409, %v2411
        %v2413 = vadd.f32 %v2409, %v2412
        %vm2414 = vweird.f32 %v2069
        %vm2415 = vweird.f32 %v2409
        %vm2416 = vmor %vm2414, %vm2415
        %v2417 = vsel %vm2416, %v2409, %v2413
        %v2418 = vand.u32 2147483647, %v2069
        %vm2419 = vcmp.eq.f32.partialorder %v2418, 8.507059e+37
        %v2420 = vand.u32 %v2069, 2147483648
        %v2421 = vor.u32 1.1754944e-38, %v2420
        %v2422 = vsel %vm2419, %v2421, %v2417
        %v2423 = vmul.f32 1.0, %v2422
        %v2424 = vrcp.pop %v2070
        %v2425 = vmul.f32 %v2070, %v2424
        %v2426 = vsub.f32 1.0, %v2425
        %v2427 = vmul.f32 %v2424, %v2426
        %v2428 = vadd.f32 %v2424, %v2427
        %vm2429 = vweird.f32 %v2070
        %vm2430 = vweird.f32 %v2424
        %vm2431 = vmor %vm2429, %vm2430
        %v2432 = vsel %vm2431, %v2424, %v2428
        %v2433 = vand.u32 2147483647, %v2070
        %vm2434 = vcmp.eq.f32.partialorder %v2433, 8.507059e+37
        %v2435 = vand.u32 %v2070, 2147483648
        %v2436 = vor.u32 1.1754944e-38, %v2435
        %v2437 = vsel %vm2434, %v2436, %v2432
        %v2438 = vmul.f32 1.0, %v2437
        %v2439 = vrcp.pop %v2071
        %v2440 = vmul.f32 %v2071, %v2439
        %v2441 = vsub.f32 1.0, %v2440
        %v2442 = vmul.f32 %v2439, %v2441
        %v2443 = vadd.f32 %v2439, %v2442
        %vm2444 = vweird.f32 %v2071
        %vm2445 = vweird.f32 %v2439
        %vm2446 = vmor %vm2444, %vm2445
        %v2447 = vsel %vm2446, %v2439, %v2443
        %v2448 = vand.u32 2147483647, %v2071
        %vm2449 = vcmp.eq.f32.partialorder %v2448, 8.507059e+37
        %v2450 = vand.u32 %v2071, 2147483648
        %v2451 = vor.u32 1.1754944e-38, %v2450
        %v2452 = vsel %vm2449, %v2451, %v2447
        %v2453 = vmul.f32 1.0, %v2452
        %v2454 = vrcp.pop %v2072
        %v2455 = vmul.f32 %v2072, %v2454
        %v2456 = vsub.f32 1.0, %v2455
        %v2457 = vmul.f32 %v2454, %v2456
        %v2458 = vadd.f32 %v2454, %v2457
        %vm2459 = vweird.f32 %v2072
        %vm2460 = vweird.f32 %v2454
        %vm2461 = vmor %vm2459, %vm2460
        %v2462 = vsel %vm2461, %v2454, %v2458
        %v2463 = vand.u32 2147483647, %v2072
        %vm2464 = vcmp.eq.f32.partialorder %v2463, 8.507059e+37
        %v2465 = vand.u32 %v2072, 2147483648
        %v2466 = vor.u32 1.1754944e-38, %v2465
        %v2467 = vsel %vm2464, %v2466, %v2462
        %v2468 = vmul.f32 1.0, %v2467
        %v2469 = vrcp.pop %v2073
        %v2470 = vmul.f32 %v2073, %v2469
        %v2471 = vsub.f32 1.0, %v2470
        %v2472 = vmul.f32 %v2469, %v2471
        %v2473 = vadd.f32 %v2469, %v2472
        %vm2474 = vweird.f32 %v2073
        %vm2475 = vweird.f32 %v2469
        %vm2476 = vmor %vm2474, %vm2475
        %v2477 = vsel %vm2476, %v2469, %v2473
        %v2478 = vand.u32 2147483647, %v2073
        %vm2479 = vcmp.eq.f32.partialorder %v2478, 8.507059e+37
        %v2480 = vand.u32 %v2073, 2147483648
        %v2481 = vor.u32 1.1754944e-38, %v2480
        %v2482 = vsel %vm2479, %v2481, %v2477
        %v2483 = vmul.f32 1.0, %v2482
        %v2484 = vrcp.pop %v2074
        %v2485 = vmul.f32 %v2074, %v2484
        %v2486 = vsub.f32 1.0, %v2485
        %v2487 = vmul.f32 %v2484, %v2486
        %v2488 = vadd.f32 %v2484, %v2487
        %vm2489 = vweird.f32 %v2074
        %vm2490 = vweird.f32 %v2484
        %vm2491 = vmor %vm2489, %vm2490
        %v2492 = vsel %vm2491, %v2484, %v2488
        %v2493 = vand.u32 2147483647, %v2074
        %vm2494 = vcmp.eq.f32.partialorder %v2493, 8.507059e+37
        %v2495 = vand.u32 %v2074, 2147483648
        %v2496 = vor.u32 1.1754944e-38, %v2495
        %v2497 = vsel %vm2494, %v2496, %v2492
        %v2498 = vmul.f32 1.0, %v2497
        %v2499 = vrcp.pop %v2075
        %v2500 = vmul.f32 %v2075, %v2499
        %v2501 = vsub.f32 1.0, %v2500
        %v2502 = vmul.f32 %v2499, %v2501
        %v2503 = vadd.f32 %v2499, %v2502
        %vm2504 = vweird.f32 %v2075
        %vm2505 = vweird.f32 %v2499
        %vm2506 = vmor %vm2504, %vm2505
        %v2507 = vsel %vm2506, %v2499, %v2503
        %v2508 = vand.u32 2147483647, %v2075
        %vm2509 = vcmp.eq.f32.partialorder %v2508, 8.507059e+37
        %v2510 = vand.u32 %v2075, 2147483648
        %v2511 = vor.u32 1.1754944e-38, %v2510
        %v2512 = vsel %vm2509, %v2511, %v2507
        %v2513 = vmul.f32 1.0, %v2512
        %v2514 = vrcp.pop %v2076
        %v2515 = vmul.f32 %v2076, %v2514
        %v2516 = vsub.f32 1.0, %v2515
        %v2517 = vmul.f32 %v2514, %v2516
        %v2518 = vadd.f32 %v2514, %v2517
        %vm2519 = vweird.f32 %v2076
        %vm2520 = vweird.f32 %v2514
        %vm2521 = vmor %vm2519, %vm2520
        %v2522 = vsel %vm2521, %v2514, %v2518
        %v2523 = vand.u32 2147483647, %v2076
        %vm2524 = vcmp.eq.f32.partialorder %v2523, 8.507059e+37
        %v2525 = vand.u32 %v2076, 2147483648
        %v2526 = vor.u32 1.1754944e-38, %v2525
        %v2527 = vsel %vm2524, %v2526, %v2522
        %v2528 = vmul.f32 1.0, %v2527
        %v2529 = vrcp.pop %v2077
        %v2530 = vmul.f32 %v2077, %v2529
        %v2531 = vsub.f32 1.0, %v2530
        %v2532 = vmul.f32 %v2529, %v2531
        %v2533 = vadd.f32 %v2529, %v2532
        %vm2534 = vweird.f32 %v2077
        %vm2535 = vweird.f32 %v2529
        %vm2536 = vmor %vm2534, %vm2535
        %v2537 = vsel %vm2536, %v2529, %v2533
        %v2538 = vand.u32 2147483647, %v2077
        %vm2539 = vcmp.eq.f32.partialorder %v2538, 8.507059e+37
        %v2540 = vand.u32 %v2077, 2147483648
        %v2541 = vor.u32 1.1754944e-38, %v2540
        %v2542 = vsel %vm2539, %v2541, %v2537
        %v2543 = vmul.f32 1.0, %v2542
        %v2544 = vrcp.pop %v2078
        %v2545 = vmul.f32 %v2078, %v2544
        %v2546 = vsub.f32 1.0, %v2545
        %v2547 = vmul.f32 %v2544, %v2546
        %v2548 = vadd.f32 %v2544, %v2547
        %vm2549 = vweird.f32 %v2078
        %vm2550 = vweird.f32 %v2544
        %vm2551 = vmor %vm2549, %vm2550
        %v2552 = vsel %vm2551, %v2544, %v2548
        %v2553 = vand.u32 2147483647, %v2078
        %vm2554 = vcmp.eq.f32.partialorder %v2553, 8.507059e+37
        %v2555 = vand.u32 %v2078, 2147483648
        %v2556 = vor.u32 1.1754944e-38, %v2555
        %v2557 = vsel %vm2554, %v2556, %v2552
        %v2558 = vmul.f32 1.0, %v2557
        %2559 = vst [vmem:[%s399] sm:$0xff] %v2093
        %2560 = vst [vmem:[%s399 + $0x8] sm:$0xff] %v2108
        %2561 = vst [vmem:[%s399 + $0x10] sm:$0xff] %v2123
        %2562 = vst [vmem:[%s399 + $0x18] sm:$0xff] %v2138
        %2563 = vst [vmem:[%s399 + $0x20] sm:$0xff] %v2153
        %2564 = vst [vmem:[%s399 + $0x28] sm:$0xff] %v2168
        %2565 = vst [vmem:[%s399 + $0x30] sm:$0xff] %v2183
        %2566 = vst [vmem:[%s399 + $0x38] sm:$0xff] %v2198
        %2567 = vst [vmem:[%s399 + $0x40] sm:$0xff] %v2213
        %2568 = vst [vmem:[%s399 + $0x48] sm:$0xff] %v2228
        %2569 = vst [vmem:[%s399 + $0x50] sm:$0xff] %v2243
        %2570 = vst [vmem:[%s399 + $0x58] sm:$0xff] %v2258
        %2571 = vst [vmem:[%s399 + $0x60] sm:$0xff] %v2273
        %2572 = vst [vmem:[%s399 + $0x68] sm:$0xff] %v2288
        %2573 = vst [vmem:[%s399 + $0x70] sm:$0xff] %v2303
        %2574 = vst [vmem:[%s399 + $0x78] sm:$0xff] %v2318
        %2575 = vst [vmem:[%s399 + $0x80] sm:$0xff] %v2333
        %2576 = vst [vmem:[%s399 + $0x88] sm:$0xff] %v2348
        %2577 = vst [vmem:[%s399 + $0x90] sm:$0xff] %v2363
        %2578 = vst [vmem:[%s399 + $0x98] sm:$0xff] %v2378
        %2579 = vst [vmem:[%s399 + $0xa0] sm:$0xff] %v2393
        %2580 = vst [vmem:[%s399 + $0xa8] sm:$0xff] %v2408
        %2581 = vst [vmem:[%s399 + $0xb0] sm:$0xff] %v2423
        %2582 = vst [vmem:[%s399 + $0xb8] sm:$0xff] %v2438
        %2583 = vst [vmem:[%s399 + $0xc0] sm:$0xff] %v2453
        %2584 = vst [vmem:[%s399 + $0xc8] sm:$0xff] %v2468
        %2585 = vst [vmem:[%s399 + $0xd0] sm:$0xff] %v2483
        %2586 = vst [vmem:[%s399 + $0xd8] sm:$0xff] %v2498
        %2587 = vst [vmem:[%s399 + $0xe0] sm:$0xff] %v2513
        %2588 = vst [vmem:[%s399 + $0xe8] sm:$0xff] %v2528
        %2589 = vst [vmem:[%s399 + $0xf0] sm:$0xff] %v2543
        %2590 = vst [vmem:[%s399 + $0xf8] sm:$0xff] %v2558
        %2591 = vst [vmem:[%s425] sm:$0xff] %v1109
        %2592 = vst [vmem:[%s425 + $0x8] sm:$0xff] %v1111
        %2593 = vst [vmem:[%s425 + $0x10] sm:$0xff] %v1114
        %2594 = vst [vmem:[%s425 + $0x18] sm:$0xff] %v1116
        %2595 = vst [vmem:[%s425 + $0x20] sm:$0xff] %v1119
        %2596 = vst [vmem:[%s425 + $0x28] sm:$0xff] %v1121
        %2597 = vst [vmem:[%s425 + $0x30] sm:$0xff] %v1124
        %2598 = vst [vmem:[%s425 + $0x38] sm:$0xff] %v1126
        %2599 = vst [vmem:[%s425 + $0x40] sm:$0xff] %v1129
        %2600 = vst [vmem:[%s425 + $0x48] sm:$0xff] %v1131
        %2601 = vst [vmem:[%s425 + $0x50] sm:$0xff] %v1134
        %2602 = vst [vmem:[%s425 + $0x58] sm:$0xff] %v1136
        %2603 = vst [vmem:[%s425 + $0x60] sm:$0xff] %v1139
        %2604 = vst [vmem:[%s425 + $0x68] sm:$0xff] %v1141
        %2605 = vst [vmem:[%s425 + $0x70] sm:$0xff] %v1144
        %2606 = vst [vmem:[%s425 + $0x78] sm:$0xff] %v1146
        %s2607 = sand.u32 %s254, 1
        %s2608 = scalar_lea.sflag [#allocation3], %s2607
        %s2609 = sand.u32 %s254, 1
        %s2610 = smul.addr %s2609, 256
        %s2611 = scalar_lea.vmem [#allocation2], %s2610
        %s2612 = smul.u32 16, %s26
        %p2613 = scmp.lt.s32.totalorder %s2612, 31
        %s2614 = scalar_select %p2613, %s2612, 31
        %s2615 = smul.addr %s2614, 8
        %s2616 = scalar_lea.vmem %s11, %s2615
        // Predicated region
        $region61: #{vae_forward.1} parent=59 // pred_check
          %p2617 = pneg %p264
        $region62: #{vae_forward.1} parent=59 // pred_check_branch
          %2619 = sbr.rel (%p2617) target = $region64
        $region63: #{vae_forward.1} parent=59 // pred_region
          %s2620 = smul.u32 16, %s26
          %2622 = vsyncadd %s2608, 0
          %s2623 = smul.addr %s2620, 2
          %s2624 = smul.addr %s2623, 8
          %s2625 = scalar_lea.hbm %s10, %s2624
          %s2626 = sshll.u32 %s2611, 4
          %s2627 = int_to_ptr.vmem [resolvable:$true] %s2626
          %s2628 = sshll.u32 %s2625, 4
          %s2629 = int_to_ptr.hbm [resolvable:$true] %s2628
          %2634 = dma.vmem_to_hbm [thread:$0]  %s2627, 4096, %s2629, %s2608, 256, 256, 16
        $region64: #{vae_forward.1} parent=59 // pred_fallthru
          _
        // Predicated region
        $region65: #{vae_forward.1} parent=59 // pred_check
          %p2635 = pneg %p290
        $region66: #{vae_forward.1} parent=59 // pred_check_branch
          %2637 = sbr.rel (%p2635) target = $region68
        $region67: #{vae_forward.1} parent=59 // pred_region
          %s2638 = smul.u32 16, %s26
        $region68: #{vae_forward.1} parent=59 // pred_fallthru
          _
      $region60: #{vae_forward.1} parent=5 // pred_fallthru
        _
      %p2639 = scmp.le.s32.totalorder 2, %s21
      // Predicated region
      $region69: #{vae_forward.1} parent=5 // pred_check
        %p2640 = pneg %p2639
      $region70: #{vae_forward.1} parent=5 // pred_check_branch
        %2642 = sbr.rel (%p2640) target = $region72
      $region71: #{vae_forward.1} parent=5 // pred_region
        %s2643 = ssub.s32 %s21, 2
        // Predicated region
        $region73: #{vae_forward.1} parent=71 // pred_check
          %p2644 = pneg %p270
        $region74: #{vae_forward.1} parent=71 // pred_check_branch
          %2646 = sbr.rel (%p2644) target = $region76
        $region75: #{vae_forward.1} parent=71 // pred_region
          %s2647 = sand.u32 %s255, 1
          %s2648 = scalar_lea.sflag [#allocation3], %s2647
          %s2649 = sand.u32 %s255, 1
          %s2650 = smul.addr %s2649, 256
          %s2651 = scalar_lea.vmem [#allocation2], %s2650
          %2653 = dma.done %s2648, 4096
        $region76: #{vae_forward.1} parent=71 // pred_fallthru
          _
        // Predicated region
        $region77: #{vae_forward.1} parent=71 // pred_check
          %p2654 = pneg %p296
        $region78: #{vae_forward.1} parent=71 // pred_check_branch
          %2656 = sbr.rel (%p2654) target = $region80
        $region79: #{vae_forward.1} parent=71 // pred_region
          %s2657 = smul.u32 16, %s27
          %p2658 = scmp.lt.s32.totalorder %s2657, 31
          %s2659 = scalar_select %p2658, %s2657, 31
          %s2660 = smul.addr %s2659, 8
          %s2661 = scalar_lea.vmem %s11, %s2660
        $region80: #{vae_forward.1} parent=71 // pred_fallthru
          _
      $region72: #{vae_forward.1} parent=5 // pred_fallthru
        _
    $region6: #{vae_forward.1} parent=1 // loop_footer
      %s25 = sadd.s32 1, %s21
    $region7: #{vae_forward.1} parent=1 // loop_footer_branch
      %20 = sbr.rel target = $region3
    $region8: #{vae_forward.1} parent=1 // loop_exit
      _
    %2662 = vsyncpa [#allocation3], 1
    %s2663 = scalar_lea.sflag [#allocation3], 1
    %2664 = vsyncpa %s2663, 1

</llo_original>
